<compile_context>
chip_gen: v6e
topology: v6e:2x2x1
jax: 0.10.0
libtpu: 0.0.40
codegen_flags: <defaults>
</compile_context>

<pallas_src>
import functools

import jax
import jax.numpy as jnp
from jax.experimental import pallas as pl
from jax.experimental.pallas import tpu as pltpu


_TILE_VMEM_BUDGET = 12 * 1024 * 1024   # target per-grid-step working set (v7x-safe)
_VMEM_LIMIT_BYTES = 40 * 1024 * 1024   # explicit scoped-VMEM limit (< v7x's 64 MiB)


# ----------------------------------------------------------------------------
# Fused kernel: conv3x3(+ReLU) [+2x2 maxpool] [+1x1 head [+L2 norm]]
# ----------------------------------------------------------------------------
def _conv_block_kernel(*refs, split_halo, do_pool, has_head, l2_norm, im2col):
    i = 0
    x_main = refs[i]; i += 1
    if split_halo:
        x_halo = refs[i]; i += 1
    w_ref = refs[i]; b_ref = refs[i + 1]; i += 2
    if has_head:
        hw_ref = refs[i]; hb_ref = refs[i + 1]; i += 2
    o_ref = refs[i]

    # Assemble the (TH+2, W+2, Cin) haloed input tile (bf16).
    if split_halo:
        xt = jnp.concatenate([x_main[0], x_halo[0]], axis=0)
    else:
        xt = x_main[0]
    hp2, wp, cin = xt.shape
    th, wo = hp2 - 2, wp - 2
    cout = w_ref.shape[-1]

    # 3x3 conv as MXU matmul(s) over the 9 shifted taps: bf16 in, f32 accum.
    cols = [xt[kh:kh + th, kw:kw + wo, :].reshape(th * wo, cin)
            for kh in range(3) for kw in range(3)]
    if im2col:
        # Lane-tile-aligned taps: one deep-K (9*Cin) matmul.
        patch = jnp.concatenate(cols, axis=-1)
        y = jnp.dot(patch, w_ref[...], preferred_element_type=jnp.float32)
    else:
        y = jnp.zeros((th * wo, cout), jnp.float32)
        for t, col in enumerate(cols):
            y = y + jnp.dot(col, w_ref[t * cin:(t + 1) * cin, :],
                            preferred_element_type=jnp.float32)

    y = jnp.maximum(y + b_ref[...], 0.0)                  # bias + ReLU in f32
    y = y.reshape(th, wo, cout)

    if do_pool:                                           # fused 2x2/2 maxpool (f32)
        y = jnp.max(y.reshape(th, wo // 2, 2, cout), axis=2)
        y = jnp.max(y.reshape(th // 2, 2, wo // 2, cout), axis=1)
        th, wo = th // 2, wo // 2

    if has_head:                                          # fused 1x1 conv head
        hc = hw_ref.shape[-1]
        z = jnp.dot(y.reshape(th * wo, cout).astype(jnp.bfloat16), hw_ref[...],
                    preferred_element_type=jnp.float32) + hb_ref[...]
        if l2_norm:                                       # channel-wise L2 via EUP rsqrt
            z = z * jax.lax.rsqrt(jnp.sum(z * z, axis=-1, keepdims=True))
        y = z.reshape(th, wo, hc)

    o_ref[...] = y.reshape((1,) + y.shape).astype(o_ref.dtype)


# ----------------------------------------------------------------------------
# Tile-height selection + wrapper
# ----------------------------------------------------------------------------
def _pick_tile_h(H, W, cin, cout, pool, head_cout, out_itemsize, budget):
    pf = 2 if pool else 1
    oc = head_cout if head_cout else cout

    def est(th):
        m = th * W
        b = 2 * th * (W + 2) * cin * 2                       # 2x-buffered bf16 input
        b += m * 9 * cin * 2                                 # tap slices / im2col patch
        b += m * cout * 4                                    # f32 conv result
        if head_cout:
            b += m * head_cout * 4                           # f32 head result
        b += 2 * (th // pf) * (W // pf) * oc * out_itemsize  # 2x-buffered output
        b += 9 * cin * cout * 2                              # packed conv weights
        if head_cout:
            b += cout * head_cout * 2                        # head weights
        return b

    cands = [H] + [d for d in range(H - 1, 1, -1) if H % d == 0 and d % 2 == 0]
    for th in cands:
        if est(th) <= budget:
            return th
    return cands[-1]


def conv_block(x, w, b, *, pool=False, head=None, l2_norm=False,
               out_dtype=jnp.bfloat16, tile_h=None, budget=_TILE_VMEM_BUDGET):
    """Fused Conv3x3(pad=1)+ReLU [+2x2 maxpool] [+1x1 head [+L2 norm]].

    x: (N, H, W, Cin) NHWC; w: (3, 3, Cin, Cout) HWIO; b: (Cout,).
    head: optional (hw, hb) with hw: (Cout, HCout), hb: (HCout,).
    Returns (N, H/pf, W/pf, Cout or HCout), pf = 2 if pool else 1.
    """
    N, H, W, Cin = x.shape
    Cout = w.shape[-1]
    head_cout = head[0].shape[-1] if head is not None else None
    OC = head_cout if head is not None else Cout
    out_itemsize = jnp.dtype(out_dtype).itemsize

    if tile_h is None:
        tile_h = _pick_tile_h(H, W, Cin, Cout, pool, head_cout, out_itemsize, budget)
    TH = int(tile_h)
    assert H % TH == 0, (H, TH)
    n_tiles = H // TH
    split = n_tiles > 1
    if split:
        assert TH % 2 == 0, TH                 # 2-row halo blocks require even TH
    if pool:
        assert TH % 2 == 0 and W % 2 == 0

    pf = 2 if pool else 1
    Ho, Wo, THo = H // pf, W // pf, TH // pf
    Wp = W + 2

    xp = jnp.pad(x.astype(jnp.bfloat16), ((0, 0), (1, 1), (1, 1), (0, 0)))
    wk = w.astype(jnp.bfloat16).reshape(9 * Cin, Cout)   # (kh, kw, cin) packed on K
    bk = b.astype(jnp.float32).reshape(1, Cout)

    blk_h = TH if split else H + 2
    inputs = [xp]
    in_specs = [pl.BlockSpec((1, blk_h, Wp, Cin), lambda n, t: (n, t, 0, 0))]
    if split:
        halo_step = TH // 2                    # halo block index in units of 2 rows
        inputs.append(xp)                      # same padded array, 2-row halo view
        in_specs.append(pl.BlockSpec((1, 2, Wp, Cin),
                                     lambda n, t: (n, (t + 1) * halo_step, 0, 0)))
    inputs += [wk, bk]
    in_specs += [pl.BlockSpec((9 * Cin, Cout), lambda n, t: (0, 0)),
                 pl.BlockSpec((1, Cout), lambda n, t: (0, 0))]
    if head is not None:
        hw, hb = head
        inputs += [hw.astype(jnp.bfloat16),
                   hb.astype(jnp.float32).reshape(1, head_cout)]
        in_specs += [pl.BlockSpec((Cout, head_cout), lambda n, t: (0, 0)),
                     pl.BlockSpec((1, head_cout), lambda n, t: (0, 0))]

    kern = functools.partial(
        _conv_block_kernel, split_halo=split, do_pool=pool,
        has_head=head is not None, l2_norm=l2_norm,
        im2col=(Cin % 128 == 0))               # lane-tile-aligned tap concat only

    return pl.pallas_call(
        kern,
        out_shape=jax.ShapeDtypeStruct((N, Ho, Wo, OC), out_dtype),
        grid=(N, n_tiles),
        in_specs=in_specs,
        out_specs=pl.BlockSpec((1, THo, Wo, OC), lambda n, t: (n, t, 0, 0)),
        compiler_params=pltpu.CompilerParams(
            dimension_semantics=("parallel", "parallel"),
            vmem_limit_bytes=_VMEM_LIMIT_BYTES),
    )(*inputs)


# ----------------------------------------------------------------------------
# Parameter init (deterministic, synthetic) and full forward
# ----------------------------------------------------------------------------
def init_params(key):
    c1, c2, c3, c4, c5, d1 = 64, 64, 128, 128, 256, 256
    conv3_shapes = {
        'conv1a': (1, c1), 'conv1b': (c1, c1),
        'conv2a': (c1, c2), 'conv2b': (c2, c2),
        'conv3a': (c2, c3), 'conv3b': (c3, c3),
        'conv4a': (c3, c4), 'conv4b': (c4, c4),
        'convPa': (c4, c5), 'convDa': (c4, c5),
    }
    conv1_shapes = {'convPb': (c5, 65), 'convDb': (c5, d1)}
    params = {}
    keys = jax.random.split(key, len(conv3_shapes) + len(conv1_shapes))
    i = 0
    for name, (cin, cout) in conv3_shapes.items():
        kw, kb = jax.random.split(keys[i]); i += 1
        w = jax.random.normal(kw, (3, 3, cin, cout), jnp.float32) / jnp.sqrt(9.0 * cin)
        bb = 0.01 * jax.random.normal(kb, (cout,), jnp.float32)
        params[name] = (w, bb)
    for name, (cin, cout) in conv1_shapes.items():
        kw, kb = jax.random.split(keys[i]); i += 1
        w = jax.random.normal(kw, (cin, cout), jnp.float32) / jnp.sqrt(1.0 * cin)
        bb = 0.01 * jax.random.normal(kb, (cout,), jnp.float32)
        params[name] = (w, bb)
    return params


def superpoint_forward(params, x_nchw):
    """Input: N x 1 x H x W (NCHW, like torch).  Output dict with NCHW tensors."""
    N, C, H, W = x_nchw.shape
    assert C == 1 and H % 8 == 0 and W % 8 == 0
    x = jnp.transpose(x_nchw, (0, 2, 3, 1)).astype(jnp.bfloat16)   # -> NHWC

    # conv1a has Cin=1: zero-pad input/weight channels to 8 so the matmul
    # K-dim lowers cleanly (zero channels x zero weights == numerically a no-op).
    w1a, b1a = params['conv1a']
    x = jnp.pad(x, ((0, 0), (0, 0), (0, 0), (0, 7)))
    w1a = jnp.pad(w1a, ((0, 0), (0, 0), (0, 7), (0, 0)))

    x = conv_block(x, w1a, b1a)                                    # conv1a
    x = conv_block(x, *params['conv1b'], pool=True)                # conv1b + pool
    x = conv_block(x, *params['conv2a'])                           # conv2a
    x = conv_block(x, *params['conv2b'], pool=True)                # conv2b + pool
    x = conv_block(x, *params['conv3a'])                           # conv3a
    x = conv_block(x, *params['conv3b'], pool=True)                # conv3b + pool
    x = conv_block(x, *params['conv4a'])                           # conv4a
    x = conv_block(x, *params['conv4b'])                           # conv4b

    # Detector head: convPa (3x3+ReLU) fused with convPb (1x1).  Pb's 65 output
    # channels are zero-padded to 128 so the kernel issues full-lane stores;
    # the first 65 channels are sliced back out here.
    wPb, bPb = params['convPb']
    wPb = jnp.pad(wPb, ((0, 0), (0, 128 - wPb.shape[1])))
    bPb = jnp.pad(bPb, ((0, 128 - bPb.shape[0]),))
    semi = conv_block(x, *params['convPa'], head=(wPb, bPb),
                      out_dtype=jnp.float32)[..., :65]

    # Descriptor head: convDa (3x3+ReLU) fused with convDb (1x1) + L2 norm.
    desc = conv_block(x, *params['convDa'], head=params['convDb'],
                      l2_norm=True, out_dtype=jnp.float32)

    return {'semi': jnp.transpose(semi, (0, 3, 1, 2)),   # N x 65  x H/8 x W/8
            'desc': jnp.transpose(desc, (0, 3, 1, 2))}   # N x 256 x H/8 x W/8


# ----------------------------------------------------------------------------
# Pure-JAX reference with the same bf16-operand / f32-accumulate discipline
# ----------------------------------------------------------------------------
_DN = ('NHWC', 'HWIO', 'NHWC')


def _ref_conv3(x, w, b, pool=False):
    y = jax.lax.conv_general_dilated(
        x.astype(jnp.bfloat16), w.astype(jnp.bfloat16), (1, 1), ((1, 1), (1, 1)),
        dimension_numbers=_DN, preferred_element_type=jnp.float32)
    y = jnp.maximum(y + b.astype(jnp.float32), 0.0)
    if pool:
        y = jax.lax.reduce_window(y, -jnp.inf, jax.lax.max,
                                  (1, 2, 2, 1), (1, 2, 2, 1), 'VALID')
    return y.astype(jnp.bfloat16)


def _ref_head(x, w, b, l2=False):
    y = jnp.einsum('nhwc,cd->nhwd', x.astype(jnp.bfloat16), w.astype(jnp.bfloat16),
                   preferred_element_type=jnp.float32) + b.astype(jnp.float32)
    if l2:
        y = y * jax.lax.rsqrt(jnp.sum(y * y, axis=-1, keepdims=True))
    return y


def _ref_forward(params, x_nchw):
    x = jnp.transpose(x_nchw, (0, 2, 3, 1)).astype(jnp.bfloat16)
    x = _ref_conv3(x, *params['conv1a'])
    x = _ref_conv3(x, *params['conv1b'], pool=True)
    x = _ref_conv3(x, *params['conv2a'])
    x = _ref_conv3(x, *params['conv2b'], pool=True)
    x = _ref_conv3(x, *params['conv3a'])
    x = _ref_conv3(x, *params['conv3b'], pool=True)
    x = _ref_conv3(x, *params['conv4a'])
    x = _ref_conv3(x, *params['conv4b'])
    cPa = _ref_conv3(x, *params['convPa'])
    semi = _ref_head(cPa, *params['convPb'])
    cDa = _ref_conv3(x, *params['convDa'])
    desc = _ref_head(cDa, *params['convDb'], l2=True)
    return {'semi': jnp.transpose(semi, (0, 3, 1, 2)),
            'desc': jnp.transpose(desc, (0, 3, 1, 2))}


if __name__ == "__main__":
    key = jax.random.PRNGKey(0)
    k_param, k_input, k_tile = jax.random.split(key, 3)

    params = init_params(k_param)
    # Small input consistent with the module: N x 1 x H x W (H, W divisible by 8).
    x = jax.random.normal(k_input, (2, 1, 16, 16), jnp.float32)

    out = jax.block_until_ready(superpoint_forward(params, x))
    assert out['semi'].shape == (2, 65, 2, 2), out['semi'].shape
    assert out['desc'].shape == (2, 256, 2, 2), out['desc'].shape

    ref = jax.block_until_ready(_ref_forward(params, x))

    def _maxerr(a, b):
        return float(jnp.max(jnp.abs(a.astype(jnp.float32) - b.astype(jnp.float32))))

    assert _maxerr(out['semi'], ref['semi']) < 2e-2, _maxerr(out['semi'], ref['semi'])
    assert _maxerr(out['desc'], ref['desc']) < 2e-2, _maxerr(out['desc'], ref['desc'])

    # Explicitly exercise the row-tiled (split-halo) multi-tile path that kicks
    # in at realistic resolutions: 4 row tiles with a fused 2x2 maxpool.
    xt = jax.random.normal(k_tile, (1, 16, 16, 64), jnp.float32)
    wt, bt = params['conv1b']
    tiled = jax.block_until_ready(conv_block(xt, wt, bt, pool=True, tile_h=4))
    tref = _ref_conv3(xt, wt, bt, pool=True)
    assert tiled.shape == (1, 8, 8, 64), tiled.shape
    assert _maxerr(tiled, tref) < 3e-2, _maxerr(tiled, tref)

    print("KERNEL_OK")
</pallas_src>

<mosaic_0001>
module attributes {stable_mosaic.version = 11 : i64} {
  func.func @_conv_block_kernel(%arg0: i32, %arg1: i32, %arg2: memref<1x18x18x8xbf16, #tpu.memory_space<vmem>>, %arg3: memref<72x64xbf16, #tpu.memory_space<vmem>>, %arg4: memref<1x64xf32, #tpu.memory_space<vmem>>, %arg5: memref<1x16x16x64xbf16, #tpu.memory_space<vmem>>) attributes {dimension_semantics = [#tpu.dimension_semantics<parallel>, #tpu.dimension_semantics<parallel>], iteration_bounds = array<i64: 2, 1>, scalar_prefetch = 0 : i64, scratch_operands = 0 : i64, tpu.core_type = #tpu.core_type<tc>, window_params = [{transform_indices = @transform_0, window_bounds = array<i64: 1, 18, 18, 8>}, {pipeline_mode = #tpu.pipeline_mode<synchronous>, transform_indices = @transform_1, window_bounds = array<i64: 72, 64>}, {pipeline_mode = #tpu.pipeline_mode<synchronous>, transform_indices = @transform_2, window_bounds = array<i64: 1, 64>}, {transform_indices = @transform_3, window_bounds = array<i64: 1, 16, 16, 64>}]} {
    %c0 = arith.constant 0 : index
    %c0_0 = arith.constant 0 : index
    %c0_1 = arith.constant 0 : index
    %c0_2 = arith.constant 0 : index
    %0 = vector.load %arg2[%c0, %c0_0, %c0_1, %c0_2] : memref<1x18x18x8xbf16, #tpu.memory_space<vmem>>, vector<1x18x18x8xbf16>
    %1 = vector.shape_cast %0 : vector<1x18x18x8xbf16> to vector<18x18x8xbf16>
    %2 = vector.extract_strided_slice %1 {offsets = [0, 0, 0], sizes = [16, 16, 8], strides = [1, 1, 1]} : vector<18x18x8xbf16> to vector<16x16x8xbf16>
    %3 = vector.shape_cast %2 : vector<16x16x8xbf16> to vector<256x8xbf16>
    %4 = vector.extract_strided_slice %1 {offsets = [0, 1, 0], sizes = [16, 16, 8], strides = [1, 1, 1]} : vector<18x18x8xbf16> to vector<16x16x8xbf16>
    %5 = vector.shape_cast %4 : vector<16x16x8xbf16> to vector<256x8xbf16>
    %6 = vector.extract_strided_slice %1 {offsets = [0, 2, 0], sizes = [16, 16, 8], strides = [1, 1, 1]} : vector<18x18x8xbf16> to vector<16x16x8xbf16>
    %7 = vector.shape_cast %6 : vector<16x16x8xbf16> to vector<256x8xbf16>
    %8 = vector.extract_strided_slice %1 {offsets = [1, 0, 0], sizes = [16, 16, 8], strides = [1, 1, 1]} : vector<18x18x8xbf16> to vector<16x16x8xbf16>
    %9 = vector.shape_cast %8 : vector<16x16x8xbf16> to vector<256x8xbf16>
    %10 = vector.extract_strided_slice %1 {offsets = [1, 1, 0], sizes = [16, 16, 8], strides = [1, 1, 1]} : vector<18x18x8xbf16> to vector<16x16x8xbf16>
    %11 = vector.shape_cast %10 : vector<16x16x8xbf16> to vector<256x8xbf16>
    %12 = vector.extract_strided_slice %1 {offsets = [1, 2, 0], sizes = [16, 16, 8], strides = [1, 1, 1]} : vector<18x18x8xbf16> to vector<16x16x8xbf16>
    %13 = vector.shape_cast %12 : vector<16x16x8xbf16> to vector<256x8xbf16>
    %14 = vector.extract_strided_slice %1 {offsets = [2, 0, 0], sizes = [16, 16, 8], strides = [1, 1, 1]} : vector<18x18x8xbf16> to vector<16x16x8xbf16>
    %15 = vector.shape_cast %14 : vector<16x16x8xbf16> to vector<256x8xbf16>
    %16 = vector.extract_strided_slice %1 {offsets = [2, 1, 0], sizes = [16, 16, 8], strides = [1, 1, 1]} : vector<18x18x8xbf16> to vector<16x16x8xbf16>
    %17 = vector.shape_cast %16 : vector<16x16x8xbf16> to vector<256x8xbf16>
    %18 = vector.extract_strided_slice %1 {offsets = [2, 2, 0], sizes = [16, 16, 8], strides = [1, 1, 1]} : vector<18x18x8xbf16> to vector<16x16x8xbf16>
    %19 = vector.shape_cast %18 : vector<16x16x8xbf16> to vector<256x8xbf16>
    %cst = arith.constant 0.000000e+00 : f32
    %20 = vector.broadcast %cst : f32 to vector<256x64xf32>
    %c0_3 = arith.constant 0 : index
    %c0_4 = arith.constant 0 : index
    %21 = vector.load %arg3[%c0_3, %c0_4] : memref<72x64xbf16, #tpu.memory_space<vmem>>, vector<8x64xbf16>
    %cst_5 = arith.constant dense<0.000000e+00> : vector<256x64xf32>
    %22 = tpu.matmul %3, %21, %cst_5 {dimension_numbers = #tpu.dot_dimension_numbers<[1], [0], [0], [1], [0, 0, 1, 1], [], []>} : vector<256x8xbf16>, vector<8x64xbf16>, vector<256x64xf32> -> vector<256x64xf32>
    %23 = arith.addf %20, %22 : vector<256x64xf32>
    %c8 = arith.constant 8 : index
    %c0_6 = arith.constant 0 : index
    %24 = vector.load %arg3[%c8, %c0_6] : memref<72x64xbf16, #tpu.memory_space<vmem>>, vector<8x64xbf16>
    %cst_7 = arith.constant dense<0.000000e+00> : vector<256x64xf32>
    %25 = tpu.matmul %5, %24, %cst_7 {dimension_numbers = #tpu.dot_dimension_numbers<[1], [0], [0], [1], [0, 0, 1, 1], [], []>} : vector<256x8xbf16>, vector<8x64xbf16>, vector<256x64xf32> -> vector<256x64xf32>
    %26 = arith.addf %23, %25 : vector<256x64xf32>
    %c16 = arith.constant 16 : index
    %c0_8 = arith.constant 0 : index
    %27 = vector.load %arg3[%c16, %c0_8] : memref<72x64xbf16, #tpu.memory_space<vmem>>, vector<8x64xbf16>
    %cst_9 = arith.constant dense<0.000000e+00> : vector<256x64xf32>
    %28 = tpu.matmul %7, %27, %cst_9 {dimension_numbers = #tpu.dot_dimension_numbers<[1], [0], [0], [1], [0, 0, 1, 1], [], []>} : vector<256x8xbf16>, vector<8x64xbf16>, vector<256x64xf32> -> vector<256x64xf32>
    %29 = arith.addf %26, %28 : vector<256x64xf32>
    %c24 = arith.constant 24 : index
    %c0_10 = arith.constant 0 : index
    %30 = vector.load %arg3[%c24, %c0_10] : memref<72x64xbf16, #tpu.memory_space<vmem>>, vector<8x64xbf16>
    %cst_11 = arith.constant dense<0.000000e+00> : vector<256x64xf32>
    %31 = tpu.matmul %9, %30, %cst_11 {dimension_numbers = #tpu.dot_dimension_numbers<[1], [0], [0], [1], [0, 0, 1, 1], [], []>} : vector<256x8xbf16>, vector<8x64xbf16>, vector<256x64xf32> -> vector<256x64xf32>
    %32 = arith.addf %29, %31 : vector<256x64xf32>
    %c32 = arith.constant 32 : index
    %c0_12 = arith.constant 0 : index
    %33 = vector.load %arg3[%c32, %c0_12] : memref<72x64xbf16, #tpu.memory_space<vmem>>, vector<8x64xbf16>
    %cst_13 = arith.constant dense<0.000000e+00> : vector<256x64xf32>
    %34 = tpu.matmul %11, %33, %cst_13 {dimension_numbers = #tpu.dot_dimension_numbers<[1], [0], [0], [1], [0, 0, 1, 1], [], []>} : vector<256x8xbf16>, vector<8x64xbf16>, vector<256x64xf32> -> vector<256x64xf32>
    %35 = arith.addf %32, %34 : vector<256x64xf32>
    %c40 = arith.constant 40 : index
    %c0_14 = arith.constant 0 : index
    %36 = vector.load %arg3[%c40, %c0_14] : memref<72x64xbf16, #tpu.memory_space<vmem>>, vector<8x64xbf16>
    %cst_15 = arith.constant dense<0.000000e+00> : vector<256x64xf32>
    %37 = tpu.matmul %13, %36, %cst_15 {dimension_numbers = #tpu.dot_dimension_numbers<[1], [0], [0], [1], [0, 0, 1, 1], [], []>} : vector<256x8xbf16>, vector<8x64xbf16>, vector<256x64xf32> -> vector<256x64xf32>
    %38 = arith.addf %35, %37 : vector<256x64xf32>
    %c48 = arith.constant 48 : index
    %c0_16 = arith.constant 0 : index
    %39 = vector.load %arg3[%c48, %c0_16] : memref<72x64xbf16, #tpu.memory_space<vmem>>, vector<8x64xbf16>
    %cst_17 = arith.constant dense<0.000000e+00> : vector<256x64xf32>
    %40 = tpu.matmul %15, %39, %cst_17 {dimension_numbers = #tpu.dot_dimension_numbers<[1], [0], [0], [1], [0, 0, 1, 1], [], []>} : vector<256x8xbf16>, vector<8x64xbf16>, vector<256x64xf32> -> vector<256x64xf32>
    %41 = arith.addf %38, %40 : vector<256x64xf32>
    %c56 = arith.constant 56 : index
    %c0_18 = arith.constant 0 : index
    %42 = vector.load %arg3[%c56, %c0_18] : memref<72x64xbf16, #tpu.memory_space<vmem>>, vector<8x64xbf16>
    %cst_19 = arith.constant dense<0.000000e+00> : vector<256x64xf32>
    %43 = tpu.matmul %17, %42, %cst_19 {dimension_numbers = #tpu.dot_dimension_numbers<[1], [0], [0], [1], [0, 0, 1, 1], [], []>} : vector<256x8xbf16>, vector<8x64xbf16>, vector<256x64xf32> -> vector<256x64xf32>
    %44 = arith.addf %41, %43 : vector<256x64xf32>
    %c64 = arith.constant 64 : index
    %c0_20 = arith.constant 0 : index
    %45 = vector.load %arg3[%c64, %c0_20] : memref<72x64xbf16, #tpu.memory_space<vmem>>, vector<8x64xbf16>
    %cst_21 = arith.constant dense<0.000000e+00> : vector<256x64xf32>
    %46 = tpu.matmul %19, %45, %cst_21 {dimension_numbers = #tpu.dot_dimension_numbers<[1], [0], [0], [1], [0, 0, 1, 1], [], []>} : vector<256x8xbf16>, vector<8x64xbf16>, vector<256x64xf32> -> vector<256x64xf32>
    %47 = arith.addf %44, %46 : vector<256x64xf32>
    %c0_22 = arith.constant 0 : index
    %c0_23 = arith.constant 0 : index
    %48 = vector.load %arg4[%c0_22, %c0_23] : memref<1x64xf32, #tpu.memory_space<vmem>>, vector<1x64xf32>
    %49 = vector.broadcast %48 : vector<1x64xf32> to vector<256x64xf32>
    %50 = arith.addf %47, %49 : vector<256x64xf32>
    %cst_24 = arith.constant 0.000000e+00 : f32
    %51 = vector.broadcast %cst_24 : f32 to vector<256x64xf32>
    %52 = arith.maximumf %50, %51 : vector<256x64xf32>
    %53 = vector.shape_cast %52 : vector<256x64xf32> to vector<16x16x64xf32>
    %54 = vector.shape_cast %53 : vector<16x16x64xf32> to vector<1x16x16x64xf32>
    %55 = arith.truncf %54 : vector<1x16x16x64xf32> to vector<1x16x16x64xbf16>
    %c0_25 = arith.constant 0 : index
    %c0_26 = arith.constant 0 : index
    %c0_27 = arith.constant 0 : index
    %c0_28 = arith.constant 0 : index
    %56 = vector.load %arg5[%c0_25, %c0_26, %c0_27, %c0_28] : memref<1x16x16x64xbf16, #tpu.memory_space<vmem>>, vector<1x16x16x64xbf16>
    tpu.vector_store %arg5[%c0_25, %c0_26, %c0_27, %c0_28], %55 {strides = array<i32>} : memref<1x16x16x64xbf16, #tpu.memory_space<vmem>>, vector<1x16x16x64xbf16>,
    return
  }
  func.func @transform_0(%arg0: i32, %arg1: i32) -> (i32, i32, i32, i32) {
    %c0_i32 = arith.constant 0 : i32
    %c0_i32_0 = arith.constant 0 : i32
    %c0_i32_1 = arith.constant 0 : i32
    return %arg0, %arg1, %c0_i32, %c0_i32_0 : i32, i32, i32, i32
  }
  func.func @transform_1(%arg0: i32, %arg1: i32) -> (i32, i32) {
    %c0_i32 = arith.constant 0 : i32
    %c0_i32_0 = arith.constant 0 : i32
    %c0_i32_1 = arith.constant 0 : i32
    return %c0_i32, %c0_i32_0 : i32, i32
  }
  func.func @transform_2(%arg0: i32, %arg1: i32) -> (i32, i32) {
    %c0_i32 = arith.constant 0 : i32
    %c0_i32_0 = arith.constant 0 : i32
    %c0_i32_1 = arith.constant 0 : i32
    return %c0_i32, %c0_i32_0 : i32, i32
  }
  func.func @transform_3(%arg0: i32, %arg1: i32) -> (i32, i32, i32, i32) {
    %c0_i32 = arith.constant 0 : i32
    %c0_i32_0 = arith.constant 0 : i32
    %c0_i32_1 = arith.constant 0 : i32
    return %arg0, %arg1, %c0_i32, %c0_i32_0 : i32, i32, i32, i32
  }
}

</mosaic_0001>

<llo_original>
// kernel: tpu_custom_call.1
$region0: #{tpu_custom_call.1}
  #allocation0 [shape = 'u32[]', space=smem, size = 0x4, offset = 0x4, fixed_abs, tag = 'smem constant byte address 0x4 - core index']
  #allocation1 [shape = 'u32[144,128]{1,0:T(1,128)}', space=vmem, size = 0x12000, scoped, tag = 'internal scratch']
  %s0 = inlined_call_operand.vmem [shape: bf16[2,18,18,8], index: 0, kind: input, shape index: {}]
  %s1 = inlined_call_operand.vmem [shape: bf16[72,64], index: 1, kind: input, shape index: {}]
  %s2 = inlined_call_operand.vmem [shape: f32[1,64], index: 2, kind: input, shape index: {}]
  %s3 = inlined_call_operand.hbm [shape: bf16[2,16,16,64], index: 3, kind: output, shape index: {}]
  %s4 = sld [smem:[#allocation0]]
  $region45: #{tpu_custom_call.1} parent=0
    _
  %s6 = ssub.s32 1, %s4
  %s7 = scalar_select 0, %s6, %s4
  $region1: #{tpu_custom_call.1} parent=0
    #allocation2 [shape = 'u8[131072]{0}', space=vmem, size = 0x20000, scoped, tag = 'output window, operand 0']
    #allocation3 [shape = 's32[2]{0}', space=sflag, size = 0x8, scoped, tag = 'scoped memory for tpu_custom_call.1']
    %8 = vsyncpa [#allocation3], 0
    %s9 = scalar_lea.sflag [#allocation3], 1
    %10 = vsyncpa %s9, 0
    loop: start=0, step=1, limit=4
    $region2: #{tpu_custom_call.1} parent=1 // loop_pre_header
      _
    $region3: #{tpu_custom_call.1} parent=1 // loop_header
      %s12 = sphi 0, %s16
      %p13 = scmp.ge.s32.totalorder %s12, 4
      %s19 = sphi 0, %s31
      %s20 = sphi 0, %s27
      %s21 = sphi 0, %s19
      %s22 = sphi 0, %s20
      %s23 = sphi 0, %s21
      %s24 = sphi 0, %s22
      %s36 = sphi 0, %s38
      %s39 = sphi 0, %s36
      %s40 = sphi 0, %s39
      %s56 = sphi 0, %s40
      %s60 = sphi 0, %s60
      %s62 = sphi 0, %s60
      %s63 = sphi 0, %s62
      %s77 = sphi 0, %s63
      %s81 = sphi 0, %s81
      %s83 = sphi 0, %s81
      %s84 = sphi 0, %s83
      %s98 = sphi 0, %s84
      %s106 = sphi 0, %s108
      %s109 = sphi 0, %s106
      %s110 = sphi 0, %s109
      %s126 = sphi 0, %s110
    $region4: #{tpu_custom_call.1} parent=1 // loop_header_branch
      %15 = sbr.rel (%p13) target = $region8
    $region5: #{tpu_custom_call.1} parent=1 // loop_body
      %s17 = ssub.s32 %s12, 1
      %s18 = ssub.s32 %s12, 2
      %s25 = sadd.s32 1, %s20
      %p26 = scmp.ge.s32.totalorder %s25, 1
      %s27 = scalar_select %p26, 0, %s25
      %s28 = sadd.s32 1, %s19
      %s29 = scalar_select %p26, %s28, %s19
      %p30 = scmp.ge.s32.totalorder %s29, 2
      %s31 = scalar_select %p30, 0, %s29
      %s32 = ssub.s32 %s19, %s31
      %s33 = ssub.s32 %s20, %s27
      %s34 = sor.u32 %s32, %s33
      %p35 = scmp.eq.s32.totalorder %s34, 0
      %s37 = sadd.s32 %s36, 1
      %s38 = scalar_select %p35, %s36, %s37
      %p41 = pneg %p35
      %p42 = scmp.eq.s32.totalorder %s12, 1
      %p43 = por %p41, %p42
      %p44 = scmp.ne.s32.totalorder %s36, %s39
      %p45 = scmp.eq.s32.totalorder %s12, 0
      %p46 = por %p44, %p45
      %p47 = scmp.ne.s32.totalorder %s36, %s39
      %p48 = scmp.eq.s32.totalorder %s17, 1
      %p49 = por %p47, %p48
      %p50 = scmp.ne.s32.totalorder %s39, %s40
      %p51 = scmp.eq.s32.totalorder %s17, 0
      %p52 = por %p50, %p51
      %p53 = scmp.ne.s32.totalorder %s39, %s40
      %p54 = scmp.eq.s32.totalorder %s18, 1
      %p55 = por %p53, %p54
      %p57 = scmp.ne.s32.totalorder %s40, %s56
      %p58 = scmp.eq.s32.totalorder %s18, 0
      %p59 = por %p57, %p58
      %s61 = sadd.s32 %s60, 1
      %p64 = scmp.eq.s32.totalorder %s12, 1
      %p65 = scmp.ne.s32.totalorder %s60, %s62
      %p66 = scmp.eq.s32.totalorder %s12, 0
      %p67 = por %p65, %p66
      %p68 = scmp.ne.s32.totalorder %s60, %s62
      %p69 = scmp.eq.s32.totalorder %s17, 1
      %p70 = por %p68, %p69
      %p71 = scmp.ne.s32.totalorder %s62, %s63
      %p72 = scmp.eq.s32.totalorder %s17, 0
      %p73 = por %p71, %p72
      %p74 = scmp.ne.s32.totalorder %s62, %s63
      %p75 = scmp.eq.s32.totalorder %s18, 1
      %p76 = por %p74, %p75
      %p78 = scmp.ne.s32.totalorder %s63, %s77
      %p79 = scmp.eq.s32.totalorder %s18, 0
      %p80 = por %p78, %p79
      %s82 = sadd.s32 %s81, 1
      %p85 = scmp.eq.s32.totalorder %s12, 1
      %p86 = scmp.ne.s32.totalorder %s81, %s83
      %p87 = scmp.eq.s32.totalorder %s12, 0
      %p88 = por %p86, %p87
      %p89 = scmp.ne.s32.totalorder %s81, %s83
      %p90 = scmp.eq.s32.totalorder %s17, 1
      %p91 = por %p89, %p90
      %p92 = scmp.ne.s32.totalorder %s83, %s84
      %p93 = scmp.eq.s32.totalorder %s17, 0
      %p94 = por %p92, %p93
      %p95 = scmp.ne.s32.totalorder %s83, %s84
      %p96 = scmp.eq.s32.totalorder %s18, 1
      %p97 = por %p95, %p96
      %p99 = scmp.ne.s32.totalorder %s84, %s98
      %p100 = scmp.eq.s32.totalorder %s18, 0
      %p101 = por %p99, %p100
      %s102 = ssub.s32 %s19, %s31
      %s103 = ssub.s32 %s20, %s27
      %s104 = sor.u32 %s102, %s103
      %p105 = scmp.eq.s32.totalorder %s104, 0
      %s107 = sadd.s32 %s106, 1
      %s108 = scalar_select %p105, %s106, %s107
      %p111 = pneg %p105
      %p112 = scmp.eq.s32.totalorder %s12, 1
      %p113 = por %p111, %p112
      %p114 = scmp.ne.s32.totalorder %s106, %s109
      %p115 = scmp.eq.s32.totalorder %s12, 0
      %p116 = por %p114, %p115
      %p117 = scmp.ne.s32.totalorder %s106, %s109
      %p118 = scmp.eq.s32.totalorder %s17, 1
      %p119 = por %p117, %p118
      %p120 = scmp.ne.s32.totalorder %s109, %s110
      %p121 = scmp.eq.s32.totalorder %s17, 0
      %p122 = por %p120, %p121
      %p123 = scmp.ne.s32.totalorder %s109, %s110
      %p124 = scmp.eq.s32.totalorder %s18, 1
      %p125 = por %p123, %p124
      %p127 = scmp.ne.s32.totalorder %s110, %s126
      %p128 = scmp.eq.s32.totalorder %s18, 0
      %p129 = por %p127, %p128
      %p130 = scmp.le.s32.totalorder 1, %s12
      %p131 = scmp.lt.s32.totalorder %s12, 3
      %p132 = pnand %p130, %p131
      %p133 = pneg %p132
      // Predicated region
      $region9: #{tpu_custom_call.1} parent=5 // pred_check
        _
      $region10: #{tpu_custom_call.1} parent=5 // pred_check_branch
        %135 = sbr.rel (%p132) target = $region12
      $region11: #{tpu_custom_call.1} parent=5 // pred_region
        %s136 = ssub.s32 %s12, 1
        // Predicated region
        $region13: #{tpu_custom_call.1} parent=11 // pred_check
          %p137 = pneg %p73
        $region14: #{tpu_custom_call.1} parent=11 // pred_check_branch
          %139 = sbr.rel (%p137) target = $region16
        $region15: #{tpu_custom_call.1} parent=11 // pred_region
          _
        $region16: #{tpu_custom_call.1} parent=11 // pred_fallthru
          _
        // Predicated region
        $region17: #{tpu_custom_call.1} parent=11 // pred_check
          %p140 = pneg %p94
        $region18: #{tpu_custom_call.1} parent=11 // pred_check_branch
          %142 = sbr.rel (%p140) target = $region20
        $region19: #{tpu_custom_call.1} parent=11 // pred_region
          _
        $region20: #{tpu_custom_call.1} parent=11 // pred_fallthru
          _
      $region12: #{tpu_custom_call.1} parent=5 // pred_fallthru
        _
      %p143 = scmp.lt.s32.totalorder %s12, 2
      // Predicated region
      $region21: #{tpu_custom_call.1} parent=5 // pred_check
        %p144 = pneg %p143
      $region22: #{tpu_custom_call.1} parent=5 // pred_check_branch
        %146 = sbr.rel (%p144) target = $region24
      $region23: #{tpu_custom_call.1} parent=5 // pred_region
        // Predicated region
        $region25: #{tpu_custom_call.1} parent=23 // pred_check
          %p147 = pneg %p46
        $region26: #{tpu_custom_call.1} parent=23 // pred_check_branch
          %149 = sbr.rel (%p147) target = $region28
        $region27: #{tpu_custom_call.1} parent=23 // pred_region
          %s150 = smul.u32 18, %s20
          %p151 = scmp.lt.s32.totalorder %s19, 1
          %s152 = scalar_select %p151, %s19, 1
          %p153 = scmp.lt.s32.totalorder %s150, 17
          %s154 = scalar_select %p153, %s150, 17
          %s155 = smul.addr %s154, 3
          %s156 = smul.addr %s152, 54
          %s157 = sadd.s32 %s155, %s156
          %s158 = smul.addr %s157, 4
          %s159 = scalar_lea.vmem %s0, %s158
          %s160 = smul.u32 18, %s20
        $region28: #{tpu_custom_call.1} parent=23 // pred_fallthru
          _
      $region24: #{tpu_custom_call.1} parent=5 // pred_fallthru
        _
      %p161 = scmp.le.s32.totalorder 1, %s12
      %p162 = scmp.lt.s32.totalorder %s12, 3
      %p163 = pnand %p161, %p162
      %p164 = pneg %p163
      // Predicated region
      $region29: #{tpu_custom_call.1} parent=5 // pred_check
        _
      $region30: #{tpu_custom_call.1} parent=5 // pred_check_branch
        %166 = sbr.rel (%p163) target = $region32
      $region31: #{tpu_custom_call.1} parent=5 // pred_region
        %s167 = ssub.s32 %s12, 1
        %s168 = smul.u32 18, %s22
        %p169 = scmp.lt.s32.totalorder %s21, 1
        %s170 = scalar_select %p169, %s21, 1
        %p171 = scmp.lt.s32.totalorder %s168, 17
        %s172 = scalar_select %p171, %s168, 17
        %s173 = smul.addr %s172, 3
        %s174 = smul.addr %s170, 54
        %s175 = sadd.s32 %s173, %s174
        %s176 = smul.addr %s175, 4
        %s177 = scalar_lea.vmem %s0, %s176
        %p178 = pneg %p52
        %p179 = pneg %p49
        %p180 = pneg %p73
        %p181 = pneg %p70
        %p182 = pneg %p94
        %p183 = pneg %p91
        %p184 = pneg %p122
        %p185 = pneg %p119
        %s186 = sand.u32 %s109, 1
        %s187 = scalar_lea.sflag [#allocation3], %s186
        %s188 = sand.u32 %s109, 1
        %s189 = smul.addr %s188, 128
        %s190 = scalar_lea.vmem [#allocation2], %s189
        %s191 = smul.u32 18, %s22
        %p192 = scmp.lt.s32.totalorder %s21, 1
        %s193 = scalar_select %p192, %s21, 1
        %p194 = scmp.lt.s32.totalorder %s191, 17
        %s195 = scalar_select %p194, %s191, 17
        %s196 = smul.addr %s195, 3
        %s197 = smul.addr %s193, 54
        %s198 = sadd.s32 %s196, %s197
        %s199 = smul.addr %s198, 4
        %s200 = scalar_lea.vmem %s0, %s199
        %s201 = smul.u32 18, %s22
        %s202 = smul.u32 16, %s22
        %v204 = vld [vmem:[%s200] sm:$0xf]
        %v205 = vld [vmem:[%s200 + $0x4] sm:$0xf]
        %v206 = vld [vmem:[%s200 + $0x8] sm:$0x1]
        %v207 = vld [vmem:[%s200 + $0xc] sm:$0xf]
        %v208 = vld [vmem:[%s200 + $0x10] sm:$0xf]
        %v209 = vld [vmem:[%s200 + $0x14] sm:$0x1]
        %v210 = vld [vmem:[%s200 + $0x18] sm:$0xf]
        %v211 = vld [vmem:[%s200 + $0x1c] sm:$0xf]
        %v212 = vld [vmem:[%s200 + $0x20] sm:$0x1]
        %v213 = vld [vmem:[%s200 + $0x24] sm:$0xf]
        %v214 = vld [vmem:[%s200 + $0x28] sm:$0xf]
        %v215 = vld [vmem:[%s200 + $0x2c] sm:$0x1]
        %v216 = vld [vmem:[%s200 + $0x30] sm:$0xf]
        %v217 = vld [vmem:[%s200 + $0x34] sm:$0xf]
        %v218 = vld [vmem:[%s200 + $0x38] sm:$0x1]
        %v219 = vld [vmem:[%s200 + $0x3c] sm:$0xf]
        %v220 = vld [vmem:[%s200 + $0x40] sm:$0xf]
        %v221 = vld [vmem:[%s200 + $0x44] sm:$0x1]
        %v222 = vld [vmem:[%s200 + $0x48] sm:$0xf]
        %v223 = vld [vmem:[%s200 + $0x4c] sm:$0xf]
        %v224 = vld [vmem:[%s200 + $0x50] sm:$0x1]
        %v225 = vld [vmem:[%s200 + $0x54] sm:$0xf]
        %v226 = vld [vmem:[%s200 + $0x58] sm:$0xf]
        %v227 = vld [vmem:[%s200 + $0x5c] sm:$0x1]
        %v228 = vld [vmem:[%s200 + $0x60] sm:$0xf]
        %v229 = vld [vmem:[%s200 + $0x64] sm:$0xf]
        %v230 = vld [vmem:[%s200 + $0x68] sm:$0x1]
        %v231 = vld [vmem:[%s200 + $0x6c] sm:$0xf]
        %v232 = vld [vmem:[%s200 + $0x70] sm:$0xf]
        %v233 = vld [vmem:[%s200 + $0x74] sm:$0x1]
        %v234 = vld [vmem:[%s200 + $0x78] sm:$0xf]
        %v235 = vld [vmem:[%s200 + $0x7c] sm:$0xf]
        %v236 = vld [vmem:[%s200 + $0x80] sm:$0x1]
        %v237 = vld [vmem:[%s200 + $0x84] sm:$0xf]
        %v238 = vld [vmem:[%s200 + $0x88] sm:$0xf]
        %v239 = vld [vmem:[%s200 + $0x8c] sm:$0x1]
        %v240 = vld [vmem:[%s200 + $0x90] sm:$0xf]
        %v241 = vld [vmem:[%s200 + $0x94] sm:$0xf]
        %v242 = vld [vmem:[%s200 + $0x98] sm:$0x1]
        %v243 = vld [vmem:[%s200 + $0x9c] sm:$0xf]
        %v244 = vld [vmem:[%s200 + $0xa0] sm:$0xf]
        %v245 = vld [vmem:[%s200 + $0xa4] sm:$0x1]
        %v246 = vld [vmem:[%s200 + $0xa8] sm:$0xf]
        %v247 = vld [vmem:[%s200 + $0xac] sm:$0xf]
        %v248 = vld [vmem:[%s200 + $0xb0] sm:$0x1]
        %v249 = vld [vmem:[%s200 + $0xb4] sm:$0xf]
        %v250 = vld [vmem:[%s200 + $0xb8] sm:$0xf]
        %v251 = vld [vmem:[%s200 + $0xbc] sm:$0x1]
        %v252 = vld [vmem:[%s200 + $0xc0] sm:$0xf]
        %v253 = vld [vmem:[%s200 + $0xc4] sm:$0xf]
        %v254 = vld [vmem:[%s200 + $0xc8] sm:$0x1]
        %v255 = vld [vmem:[%s200 + $0xcc] sm:$0xf]
        %v256 = vld [vmem:[%s200 + $0xd0] sm:$0xf]
        %v257 = vld [vmem:[%s200 + $0xd4] sm:$0x1]
        %vm258 = vsmask.f32 3328
        %vm259 = vsmask.f32 7440
        %vm260 = vmor %vm258, %vm259
        %v262 = vshrl.u32 %v204, 16
        %v264 = vrot.slane %v262, 4
        %v265 = vshll.u32 %v204, 16
        %v267 = vrot.slane %v265, 5
        %v268 = vor.u32 %v264, %v267
        %v269 = vrot.slane %v268, 4
        %v271 = vshll.u32 %v205, 16
        %v273 = vrot.slane %v271, 5
        %v274 = vsel %vm260, %v269, %v273
        %v275 = vshrl.u32 %v205, 16
        %v277 = vrot.slane %v275, 4
        %v278 = vor.u32 %v277, %v273
        %v279 = vrot.slane %v278, 4
        %v281 = vshll.u32 %v206, 16
        %v283 = vrot.slane %v281, 5
        %v284 = vsel %vm260, %v279, %v283
        %v286 = vshrl.u32 %v207, 16
        %v288 = vrot.slane %v286, 4
        %v289 = vshll.u32 %v207, 16
        %v291 = vrot.slane %v289, 5
        %v292 = vor.u32 %v288, %v291
        %v293 = vrot.slane %v292, 4
        %v295 = vshll.u32 %v208, 16
        %v297 = vrot.slane %v295, 5
        %v298 = vsel %vm260, %v293, %v297
        %v299 = vshrl.u32 %v208, 16
        %v301 = vrot.slane %v299, 4
        %v302 = vor.u32 %v301, %v297
        %v303 = vrot.slane %v302, 4
        %v305 = vshll.u32 %v209, 16
        %v307 = vrot.slane %v305, 5
        %v308 = vsel %vm260, %v303, %v307
        %v310 = vshrl.u32 %v210, 16
        %v312 = vrot.slane %v310, 4
        %v313 = vshll.u32 %v210, 16
        %v315 = vrot.slane %v313, 5
        %v316 = vor.u32 %v312, %v315
        %v317 = vrot.slane %v316, 4
        %v319 = vshll.u32 %v211, 16
        %v321 = vrot.slane %v319, 5
        %v322 = vsel %vm260, %v317, %v321
        %v323 = vshrl.u32 %v211, 16
        %v325 = vrot.slane %v323, 4
        %v326 = vor.u32 %v325, %v321
        %v327 = vrot.slane %v326, 4
        %v329 = vshll.u32 %v212, 16
        %v331 = vrot.slane %v329, 5
        %v332 = vsel %vm260, %v327, %v331
        %v334 = vshrl.u32 %v213, 16
        %v336 = vrot.slane %v334, 4
        %v337 = vshll.u32 %v213, 16
        %v339 = vrot.slane %v337, 5
        %v340 = vor.u32 %v336, %v339
        %v341 = vrot.slane %v340, 4
        %v343 = vshll.u32 %v214, 16
        %v345 = vrot.slane %v343, 5
        %v346 = vsel %vm260, %v341, %v345
        %v347 = vshrl.u32 %v214, 16
        %v349 = vrot.slane %v347, 4
        %v350 = vor.u32 %v349, %v345
        %v351 = vrot.slane %v350, 4
        %v353 = vshll.u32 %v215, 16
        %v355 = vrot.slane %v353, 5
        %v356 = vsel %vm260, %v351, %v355
        %v358 = vshrl.u32 %v216, 16
        %v360 = vrot.slane %v358, 4
        %v361 = vshll.u32 %v216, 16
        %v363 = vrot.slane %v361, 5
        %v364 = vor.u32 %v360, %v363
        %v365 = vrot.slane %v364, 4
        %v367 = vshll.u32 %v217, 16
        %v369 = vrot.slane %v367, 5
        %v370 = vsel %vm260, %v365, %v369
        %v371 = vshrl.u32 %v217, 16
        %v373 = vrot.slane %v371, 4
        %v374 = vor.u32 %v373, %v369
        %v375 = vrot.slane %v374, 4
        %v377 = vshll.u32 %v218, 16
        %v379 = vrot.slane %v377, 5
        %v380 = vsel %vm260, %v375, %v379
        %v382 = vshrl.u32 %v219, 16
        %v384 = vrot.slane %v382, 4
        %v385 = vshll.u32 %v219, 16
        %v387 = vrot.slane %v385, 5
        %v388 = vor.u32 %v384, %v387
        %v389 = vrot.slane %v388, 4
        %v391 = vshll.u32 %v220, 16
        %v393 = vrot.slane %v391, 5
        %v394 = vsel %vm260, %v389, %v393
        %v395 = vshrl.u32 %v220, 16
        %v397 = vrot.slane %v395, 4
        %v398 = vor.u32 %v397, %v393
        %v399 = vrot.slane %v398, 4
        %v401 = vshll.u32 %v221, 16
        %v403 = vrot.slane %v401, 5
        %v404 = vsel %vm260, %v399, %v403
        %v406 = vshrl.u32 %v222, 16
        %v408 = vrot.slane %v406, 4
        %v409 = vshll.u32 %v222, 16
        %v411 = vrot.slane %v409, 5
        %v412 = vor.u32 %v408, %v411
        %v413 = vrot.slane %v412, 4
        %v415 = vshll.u32 %v223, 16
        %v417 = vrot.slane %v415, 5
        %v418 = vsel %vm260, %v413, %v417
        %v419 = vshrl.u32 %v223, 16
        %v421 = vrot.slane %v419, 4
        %v422 = vor.u32 %v421, %v417
        %v423 = vrot.slane %v422, 4
        %v425 = vshll.u32 %v224, 16
        %v427 = vrot.slane %v425, 5
        %v428 = vsel %vm260, %v423, %v427
        %v430 = vshrl.u32 %v225, 16
        %v432 = vrot.slane %v430, 4
        %v433 = vshll.u32 %v225, 16
        %v435 = vrot.slane %v433, 5
        %v436 = vor.u32 %v432, %v435
        %v437 = vrot.slane %v436, 4
        %v439 = vshll.u32 %v226, 16
        %v441 = vrot.slane %v439, 5
        %v442 = vsel %vm260, %v437, %v441
        %v443 = vshrl.u32 %v226, 16
        %v445 = vrot.slane %v443, 4
        %v446 = vor.u32 %v445, %v441
        %v447 = vrot.slane %v446, 4
        %v449 = vshll.u32 %v227, 16
        %v451 = vrot.slane %v449, 5
        %v452 = vsel %vm260, %v447, %v451
        %v454 = vshrl.u32 %v228, 16
        %v456 = vrot.slane %v454, 4
        %v457 = vshll.u32 %v228, 16
        %v459 = vrot.slane %v457, 5
        %v460 = vor.u32 %v456, %v459
        %v461 = vrot.slane %v460, 4
        %v463 = vshll.u32 %v229, 16
        %v465 = vrot.slane %v463, 5
        %v466 = vsel %vm260, %v461, %v465
        %v467 = vshrl.u32 %v229, 16
        %v469 = vrot.slane %v467, 4
        %v470 = vor.u32 %v469, %v465
        %v471 = vrot.slane %v470, 4
        %v473 = vshll.u32 %v230, 16
        %v475 = vrot.slane %v473, 5
        %v476 = vsel %vm260, %v471, %v475
        %v478 = vshrl.u32 %v231, 16
        %v480 = vrot.slane %v478, 4
        %v481 = vshll.u32 %v231, 16
        %v483 = vrot.slane %v481, 5
        %v484 = vor.u32 %v480, %v483
        %v485 = vrot.slane %v484, 4
        %v487 = vshll.u32 %v232, 16
        %v489 = vrot.slane %v487, 5
        %v490 = vsel %vm260, %v485, %v489
        %v491 = vshrl.u32 %v232, 16
        %v493 = vrot.slane %v491, 4
        %v494 = vor.u32 %v493, %v489
        %v495 = vrot.slane %v494, 4
        %v497 = vshll.u32 %v233, 16
        %v499 = vrot.slane %v497, 5
        %v500 = vsel %vm260, %v495, %v499
        %v502 = vshrl.u32 %v234, 16
        %v504 = vrot.slane %v502, 4
        %v505 = vshll.u32 %v234, 16
        %v507 = vrot.slane %v505, 5
        %v508 = vor.u32 %v504, %v507
        %v509 = vrot.slane %v508, 4
        %v511 = vshll.u32 %v235, 16
        %v513 = vrot.slane %v511, 5
        %v514 = vsel %vm260, %v509, %v513
        %v515 = vshrl.u32 %v235, 16
        %v517 = vrot.slane %v515, 4
        %v518 = vor.u32 %v517, %v513
        %v519 = vrot.slane %v518, 4
        %v521 = vshll.u32 %v236, 16
        %v523 = vrot.slane %v521, 5
        %v524 = vsel %vm260, %v519, %v523
        %v526 = vshrl.u32 %v237, 16
        %v528 = vrot.slane %v526, 4
        %v529 = vshll.u32 %v237, 16
        %v531 = vrot.slane %v529, 5
        %v532 = vor.u32 %v528, %v531
        %v533 = vrot.slane %v532, 4
        %v535 = vshll.u32 %v238, 16
        %v537 = vrot.slane %v535, 5
        %v538 = vsel %vm260, %v533, %v537
        %v539 = vshrl.u32 %v238, 16
        %v541 = vrot.slane %v539, 4
        %v542 = vor.u32 %v541, %v537
        %v543 = vrot.slane %v542, 4
        %v545 = vshll.u32 %v239, 16
        %v547 = vrot.slane %v545, 5
        %v548 = vsel %vm260, %v543, %v547
        %v550 = vshrl.u32 %v240, 16
        %v552 = vrot.slane %v550, 4
        %v553 = vshll.u32 %v240, 16
        %v555 = vrot.slane %v553, 5
        %v556 = vor.u32 %v552, %v555
        %v557 = vrot.slane %v556, 4
        %v559 = vshll.u32 %v241, 16
        %v561 = vrot.slane %v559, 5
        %v562 = vsel %vm260, %v557, %v561
        %v563 = vshrl.u32 %v241, 16
        %v565 = vrot.slane %v563, 4
        %v566 = vor.u32 %v565, %v561
        %v567 = vrot.slane %v566, 4
        %v569 = vshll.u32 %v242, 16
        %v571 = vrot.slane %v569, 5
        %v572 = vsel %vm260, %v567, %v571
        %v574 = vshrl.u32 %v243, 16
        %v576 = vrot.slane %v574, 4
        %v577 = vshll.u32 %v243, 16
        %v579 = vrot.slane %v577, 5
        %v580 = vor.u32 %v576, %v579
        %v581 = vrot.slane %v580, 4
        %v583 = vshll.u32 %v244, 16
        %v585 = vrot.slane %v583, 5
        %v586 = vsel %vm260, %v581, %v585
        %v587 = vshrl.u32 %v244, 16
        %v589 = vrot.slane %v587, 4
        %v590 = vor.u32 %v589, %v585
        %v591 = vrot.slane %v590, 4
        %v593 = vshll.u32 %v245, 16
        %v595 = vrot.slane %v593, 5
        %v596 = vsel %vm260, %v591, %v595
        %v598 = vshrl.u32 %v246, 16
        %v600 = vrot.slane %v598, 4
        %v601 = vshll.u32 %v246, 16
        %v603 = vrot.slane %v601, 5
        %v604 = vor.u32 %v600, %v603
        %v605 = vrot.slane %v604, 4
        %v607 = vshll.u32 %v247, 16
        %v609 = vrot.slane %v607, 5
        %v610 = vsel %vm260, %v605, %v609
        %v611 = vshrl.u32 %v247, 16
        %v613 = vrot.slane %v611, 4
        %v614 = vor.u32 %v613, %v609
        %v615 = vrot.slane %v614, 4
        %v617 = vshll.u32 %v248, 16
        %v619 = vrot.slane %v617, 5
        %v620 = vsel %vm260, %v615, %v619
        %v622 = vshrl.u32 %v249, 16
        %v624 = vrot.slane %v622, 4
        %v625 = vshll.u32 %v249, 16
        %v627 = vrot.slane %v625, 5
        %v628 = vor.u32 %v624, %v627
        %v629 = vrot.slane %v628, 4
        %v631 = vshll.u32 %v250, 16
        %v633 = vrot.slane %v631, 5
        %v634 = vsel %vm260, %v629, %v633
        %v635 = vshrl.u32 %v250, 16
        %v637 = vrot.slane %v635, 4
        %v638 = vor.u32 %v637, %v633
        %v639 = vrot.slane %v638, 4
        %v641 = vshll.u32 %v251, 16
        %v643 = vrot.slane %v641, 5
        %v644 = vsel %vm260, %v639, %v643
        %vm693 = vcmask 1042432
        %vm694 = vcmask 1046532
        %vm695 = vmor %vm693, %vm694
        %v696 = vrot.slane %v204, 5
        %v697 = vrot.slane %v696, 4
        %v698 = vrot.slane %v205, 5
        %v699 = vsel %vm695, %v697, %v698
        %v700 = vrot.slane %v698, 4
        %v701 = vrot.slane %v206, 5
        %v702 = vsel %vm695, %v700, %v701
        %v703 = vrot.slane %v207, 5
        %v704 = vrot.slane %v703, 4
        %v705 = vrot.slane %v208, 5
        %v706 = vsel %vm695, %v704, %v705
        %v707 = vrot.slane %v705, 4
        %v708 = vrot.slane %v209, 5
        %v709 = vsel %vm695, %v707, %v708
        %v710 = vrot.slane %v210, 5
        %v711 = vrot.slane %v710, 4
        %v712 = vrot.slane %v211, 5
        %v713 = vsel %vm695, %v711, %v712
        %v714 = vrot.slane %v712, 4
        %v715 = vrot.slane %v212, 5
        %v716 = vsel %vm695, %v714, %v715
        %v717 = vrot.slane %v213, 5
        %v718 = vrot.slane %v717, 4
        %v719 = vrot.slane %v214, 5
        %v720 = vsel %vm695, %v718, %v719
        %v721 = vrot.slane %v719, 4
        %v722 = vrot.slane %v215, 5
        %v723 = vsel %vm695, %v721, %v722
        %v724 = vrot.slane %v216, 5
        %v725 = vrot.slane %v724, 4
        %v726 = vrot.slane %v217, 5
        %v727 = vsel %vm695, %v725, %v726
        %v728 = vrot.slane %v726, 4
        %v729 = vrot.slane %v218, 5
        %v730 = vsel %vm695, %v728, %v729
        %v731 = vrot.slane %v219, 5
        %v732 = vrot.slane %v731, 4
        %v733 = vrot.slane %v220, 5
        %v734 = vsel %vm695, %v732, %v733
        %v735 = vrot.slane %v733, 4
        %v736 = vrot.slane %v221, 5
        %v737 = vsel %vm695, %v735, %v736
        %v738 = vrot.slane %v222, 5
        %v739 = vrot.slane %v738, 4
        %v740 = vrot.slane %v223, 5
        %v741 = vsel %vm695, %v739, %v740
        %v742 = vrot.slane %v740, 4
        %v743 = vrot.slane %v224, 5
        %v744 = vsel %vm695, %v742, %v743
        %v745 = vrot.slane %v225, 5
        %v746 = vrot.slane %v745, 4
        %v747 = vrot.slane %v226, 5
        %v748 = vsel %vm695, %v746, %v747
        %v749 = vrot.slane %v747, 4
        %v750 = vrot.slane %v227, 5
        %v751 = vsel %vm695, %v749, %v750
        %v752 = vrot.slane %v228, 5
        %v753 = vrot.slane %v752, 4
        %v754 = vrot.slane %v229, 5
        %v755 = vsel %vm695, %v753, %v754
        %v756 = vrot.slane %v754, 4
        %v757 = vrot.slane %v230, 5
        %v758 = vsel %vm695, %v756, %v757
        %v759 = vrot.slane %v231, 5
        %v760 = vrot.slane %v759, 4
        %v761 = vrot.slane %v232, 5
        %v762 = vsel %vm695, %v760, %v761
        %v763 = vrot.slane %v761, 4
        %v764 = vrot.slane %v233, 5
        %v765 = vsel %vm695, %v763, %v764
        %v766 = vrot.slane %v234, 5
        %v767 = vrot.slane %v766, 4
        %v768 = vrot.slane %v235, 5
        %v769 = vsel %vm695, %v767, %v768
        %v770 = vrot.slane %v768, 4
        %v771 = vrot.slane %v236, 5
        %v772 = vsel %vm695, %v770, %v771
        %v773 = vrot.slane %v237, 5
        %v774 = vrot.slane %v773, 4
        %v775 = vrot.slane %v238, 5
        %v776 = vsel %vm695, %v774, %v775
        %v777 = vrot.slane %v775, 4
        %v778 = vrot.slane %v239, 5
        %v779 = vsel %vm695, %v777, %v778
        %v780 = vrot.slane %v240, 5
        %v781 = vrot.slane %v780, 4
        %v782 = vrot.slane %v241, 5
        %v783 = vsel %vm695, %v781, %v782
        %v784 = vrot.slane %v782, 4
        %v785 = vrot.slane %v242, 5
        %v786 = vsel %vm695, %v784, %v785
        %v787 = vrot.slane %v243, 5
        %v788 = vrot.slane %v787, 4
        %v789 = vrot.slane %v244, 5
        %v790 = vsel %vm695, %v788, %v789
        %v791 = vrot.slane %v789, 4
        %v792 = vrot.slane %v245, 5
        %v793 = vsel %vm695, %v791, %v792
        %v794 = vrot.slane %v246, 5
        %v795 = vrot.slane %v794, 4
        %v796 = vrot.slane %v247, 5
        %v797 = vsel %vm695, %v795, %v796
        %v798 = vrot.slane %v796, 4
        %v799 = vrot.slane %v248, 5
        %v800 = vsel %vm695, %v798, %v799
        %v801 = vrot.slane %v249, 5
        %v802 = vrot.slane %v801, 4
        %v803 = vrot.slane %v250, 5
        %v804 = vsel %vm695, %v802, %v803
        %v805 = vrot.slane %v803, 4
        %v806 = vrot.slane %v251, 5
        %v807 = vsel %vm695, %v805, %v806
        %v809 = vshrl.u32 %v252, 16
        %v811 = vrot.slane %v809, 4
        %v812 = vshll.u32 %v252, 16
        %v814 = vrot.slane %v812, 5
        %v815 = vor.u32 %v811, %v814
        %v816 = vrot.slane %v815, 4
        %v818 = vshll.u32 %v253, 16
        %v820 = vrot.slane %v818, 5
        %v821 = vsel %vm260, %v816, %v820
        %v822 = vshrl.u32 %v253, 16
        %v824 = vrot.slane %v822, 4
        %v825 = vor.u32 %v824, %v820
        %v826 = vrot.slane %v825, 4
        %v828 = vshll.u32 %v254, 16
        %v830 = vrot.slane %v828, 5
        %v831 = vsel %vm260, %v826, %v830
        %v835 = vrot.slane %v252, 5
        %v836 = vrot.slane %v835, 4
        %v837 = vrot.slane %v253, 5
        %v838 = vsel %vm695, %v836, %v837
        %v839 = vrot.slane %v837, 4
        %v840 = vrot.slane %v254, 5
        %v841 = vsel %vm695, %v839, %v840
        %v843 = vshrl.u32 %v255, 16
        %v845 = vrot.slane %v843, 4
        %v846 = vshll.u32 %v255, 16
        %v848 = vrot.slane %v846, 5
        %v849 = vor.u32 %v845, %v848
        %v850 = vrot.slane %v849, 4
        %v852 = vshll.u32 %v256, 16
        %v854 = vrot.slane %v852, 5
        %v855 = vsel %vm260, %v850, %v854
        %v856 = vshrl.u32 %v256, 16
        %v858 = vrot.slane %v856, 4
        %v859 = vor.u32 %v858, %v854
        %v860 = vrot.slane %v859, 4
        %v862 = vshll.u32 %v257, 16
        %v864 = vrot.slane %v862, 5
        %v865 = vsel %vm260, %v860, %v864
        %v869 = vrot.slane %v255, 5
        %v870 = vrot.slane %v869, 4
        %v871 = vrot.slane %v256, 5
        %v872 = vsel %vm695, %v870, %v871
        %v873 = vrot.slane %v871, 4
        %v874 = vrot.slane %v257, 5
        %v875 = vsel %vm695, %v873, %v874
        %v876 = vld [vmem:[%s1] sm:$0xf]
        %v877 = vld [vmem:[%s1 + $0x4] sm:$0xf]
        %v878 = vunpack.c.l.b16 %v274
        %v879 = vunpack.c.l.b16 %v284
        %v880 = vunpack.c.l.b16 %v298
        %v881 = vunpack.c.l.b16 %v308
        %v882 = vunpack.c.l.b16 %v322
        %v883 = vunpack.c.l.b16 %v332
        %v884 = vunpack.c.l.b16 %v346
        %v885 = vunpack.c.l.b16 %v356
        %v886 = vunpack.c.l.b16 %v370
        %v887 = vunpack.c.l.b16 %v380
        %v888 = vunpack.c.l.b16 %v394
        %v889 = vunpack.c.l.b16 %v404
        %v890 = vunpack.c.l.b16 %v418
        %v891 = vunpack.c.l.b16 %v428
        %v892 = vunpack.c.l.b16 %v442
        %v893 = vunpack.c.l.b16 %v452
        %v894 = vunpack.c.l.b16 %v466
        %v895 = vunpack.c.l.b16 %v476
        %v896 = vunpack.c.l.b16 %v490
        %v897 = vunpack.c.l.b16 %v500
        %v898 = vunpack.c.l.b16 %v514
        %v899 = vunpack.c.l.b16 %v524
        %v900 = vunpack.c.l.b16 %v538
        %v901 = vunpack.c.l.b16 %v548
        %v902 = vunpack.c.l.b16 %v562
        %v903 = vunpack.c.l.b16 %v572
        %v904 = vunpack.c.l.b16 %v586
        %v905 = vunpack.c.l.b16 %v596
        %v906 = vunpack.c.l.b16 %v610
        %v907 = vunpack.c.l.b16 %v620
        %v908 = vunpack.c.l.b16 %v634
        %v909 = vunpack.c.l.b16 %v644
        %v910 = vpack.c.b16 %v879, %v878
        %v911 = vpack.c.b16 %v881, %v880
        %v912 = vpack.c.b16 %v883, %v882
        %v913 = vpack.c.b16 %v885, %v884
        %v914 = vpack.c.b16 %v887, %v886
        %v915 = vpack.c.b16 %v889, %v888
        %v916 = vpack.c.b16 %v891, %v890
        %v917 = vpack.c.b16 %v893, %v892
        %v918 = vpack.c.b16 %v895, %v894
        %v919 = vpack.c.b16 %v897, %v896
        %v920 = vpack.c.b16 %v899, %v898
        %v921 = vpack.c.b16 %v901, %v900
        %v922 = vpack.c.b16 %v903, %v902
        %v923 = vpack.c.b16 %v905, %v904
        %v924 = vpack.c.b16 %v907, %v906
        %v925 = vpack.c.b16 %v909, %v908
        %vm926 = vcmask 64512
        %v928 = vsel %vm926, %v910, 0
        %v931 = vsel %vm926, %v911, 0
        %v934 = vsel %vm926, %v912, 0
        %v937 = vsel %vm926, %v913, 0
        %v940 = vsel %vm926, %v914, 0
        %v943 = vsel %vm926, %v915, 0
        %v946 = vsel %vm926, %v916, 0
        %v949 = vsel %vm926, %v917, 0
        %v952 = vsel %vm926, %v918, 0
        %v955 = vsel %vm926, %v919, 0
        %v958 = vsel %vm926, %v920, 0
        %v961 = vsel %vm926, %v921, 0
        %v964 = vsel %vm926, %v922, 0
        %v967 = vsel %vm926, %v923, 0
        %v970 = vsel %vm926, %v924, 0
        %v973 = vsel %vm926, %v925, 0
        %vm975 = vcmask 1043456
        %v977 = vsel %vm975, %v877, 0
        %979 = vmatprep.subr.bf16.mxu0 0
        %980 = vmatpush1.bf16.msra.mxu0 0
        %981 = vmatprep.subr.bf16.mxu0 0
        %982 = vmatpush1.bf16.msra.mxu0 0
        %983 = vmatprep.subr.bf16.mxu0 0
        %984 = vmatpush1.bf16.msra.mxu0 0
        %985 = vmatprep.subr.bf16.mxu0 0
        %986 = vmatpush1.bf16.msra.mxu0 0
        %987 = vmatprep.subr.bf16.mxu0 0
        %988 = vmatpush1.bf16.msra.mxu0 0
        %989 = vmatprep.subr.bf16.mxu0 0
        %990 = vmatpush1.bf16.msra.mxu0 0
        %991 = vmatprep.subr.bf16.mxu0 0
        %992 = vmatpush1.bf16.msra.mxu0 0
        %993 = vmatprep.subr.bf16.mxu0 0
        %994 = vmatpush1.bf16.msra.mxu0 %v977
        %995 = vmatprep.subr.bf16.mxu0 0
        %996 = vmatpush2.bf16.msra.mxu0 0
        %997 = vmatprep.subr.bf16.mxu0 0
        %998 = vmatpush2.bf16.msra.mxu0 0
        %999 = vmatprep.subr.bf16.mxu0 0
        %1000 = vmatpush2.bf16.msra.mxu0 0
        %1001 = vmatprep.subr.bf16.mxu0 0
        %1002 = vmatpush2.bf16.msra.mxu0 0
        %1003 = vmatprep.subr.bf16.mxu0 0
        %1004 = vmatpush2.bf16.msra.mxu0 0
        %1005 = vmatprep.subr.bf16.mxu0 0
        %1006 = vmatpush2.bf16.msra.mxu0 0
        %1007 = vmatprep.subr.bf16.mxu0 0
        %1008 = vmatpush2.bf16.msra.mxu0 0
        %1009 = vmatprep.subr.bf16.mxu0 0
        %1010 = vmatpush2.bf16.msra.mxu0 0
        %1011 = vmatprep.mubr.bf16.mxu0 0
        %1012 = vmatmul.mubr.bf16.gmra.mxu0 %v928
        %v1013 = vpop.f32.mrf.mxu0
        %v1014 = vadd.f32 0.0, %v1013
        %v1015 = vpop.f32.mrf.mxu0
        %v1016 = vpop.f32.mrf.mxu0
        %v1017 = vadd.f32 0.0, %v1016
        %v1018 = vpop.f32.mrf.mxu0
        %1019 = vmatprep.mubr.bf16.mxu0 0
        %1020 = vmatmul.mubr.bf16.gmra.mxu0 %v931
        %v1021 = vpop.f32.mrf.mxu0
        %v1022 = vadd.f32 0.0, %v1021
        %v1023 = vpop.f32.mrf.mxu0
        %v1024 = vpop.f32.mrf.mxu0
        %v1025 = vadd.f32 0.0, %v1024
        %v1026 = vpop.f32.mrf.mxu0
        %1027 = vmatprep.mubr.bf16.mxu0 0
        %1028 = vmatmul.mubr.bf16.gmra.mxu0 %v934
        %v1029 = vpop.f32.mrf.mxu0
        %v1030 = vadd.f32 0.0, %v1029
        %v1031 = vpop.f32.mrf.mxu0
        %v1032 = vpop.f32.mrf.mxu0
        %v1033 = vadd.f32 0.0, %v1032
        %v1034 = vpop.f32.mrf.mxu0
        %1035 = vmatprep.mubr.bf16.mxu0 0
        %1036 = vmatmul.mubr.bf16.gmra.mxu0 %v937
        %v1037 = vpop.f32.mrf.mxu0
        %v1038 = vadd.f32 0.0, %v1037
        %v1039 = vpop.f32.mrf.mxu0
        %v1040 = vpop.f32.mrf.mxu0
        %v1041 = vadd.f32 0.0, %v1040
        %v1042 = vpop.f32.mrf.mxu0
        %1043 = vmatprep.mubr.bf16.mxu0 0
        %1044 = vmatmul.mubr.bf16.gmra.mxu0 %v940
        %v1045 = vpop.f32.mrf.mxu0
        %v1046 = vadd.f32 0.0, %v1045
        %v1047 = vpop.f32.mrf.mxu0
        %v1048 = vpop.f32.mrf.mxu0
        %v1049 = vadd.f32 0.0, %v1048
        %v1050 = vpop.f32.mrf.mxu0
        %1051 = vmatprep.mubr.bf16.mxu0 0
        %1052 = vmatmul.mubr.bf16.gmra.mxu0 %v943
        %v1053 = vpop.f32.mrf.mxu0
        %v1054 = vadd.f32 0.0, %v1053
        %v1055 = vpop.f32.mrf.mxu0
        %v1056 = vpop.f32.mrf.mxu0
        %v1057 = vadd.f32 0.0, %v1056
        %v1058 = vpop.f32.mrf.mxu0
        %1059 = vmatprep.mubr.bf16.mxu0 0
        %1060 = vmatmul.mubr.bf16.gmra.mxu0 %v946
        %v1061 = vpop.f32.mrf.mxu0
        %v1062 = vadd.f32 0.0, %v1061
        %v1063 = vpop.f32.mrf.mxu0
        %v1064 = vpop.f32.mrf.mxu0
        %v1065 = vadd.f32 0.0, %v1064
        %v1066 = vpop.f32.mrf.mxu0
        %1067 = vmatprep.mubr.bf16.mxu0 0
        %1068 = vmatmul.mubr.bf16.gmra.mxu0 %v949
        %v1069 = vpop.f32.mrf.mxu0
        %v1070 = vadd.f32 0.0, %v1069
        %v1071 = vpop.f32.mrf.mxu0
        %v1072 = vpop.f32.mrf.mxu0
        %v1073 = vadd.f32 0.0, %v1072
        %v1074 = vpop.f32.mrf.mxu0
        %1075 = vmatprep.mubr.bf16.mxu0 0
        %1076 = vmatmul.mubr.bf16.gmra.mxu0 %v952
        %v1077 = vpop.f32.mrf.mxu0
        %v1078 = vadd.f32 0.0, %v1077
        %v1079 = vpop.f32.mrf.mxu0
        %v1080 = vpop.f32.mrf.mxu0
        %v1081 = vadd.f32 0.0, %v1080
        %v1082 = vpop.f32.mrf.mxu0
        %1083 = vmatprep.mubr.bf16.mxu0 0
        %1084 = vmatmul.mubr.bf16.gmra.mxu0 %v955
        %v1085 = vpop.f32.mrf.mxu0
        %v1086 = vadd.f32 0.0, %v1085
        %v1087 = vpop.f32.mrf.mxu0
        %v1088 = vpop.f32.mrf.mxu0
        %v1089 = vadd.f32 0.0, %v1088
        %v1090 = vpop.f32.mrf.mxu0
        %1091 = vmatprep.mubr.bf16.mxu0 0
        %1092 = vmatmul.mubr.bf16.gmra.mxu0 %v958
        %v1093 = vpop.f32.mrf.mxu0
        %v1094 = vadd.f32 0.0, %v1093
        %v1095 = vpop.f32.mrf.mxu0
        %v1096 = vpop.f32.mrf.mxu0
        %v1097 = vadd.f32 0.0, %v1096
        %v1098 = vpop.f32.mrf.mxu0
        %1099 = vmatprep.mubr.bf16.mxu0 0
        %1100 = vmatmul.mubr.bf16.gmra.mxu0 %v961
        %v1101 = vpop.f32.mrf.mxu0
        %v1102 = vadd.f32 0.0, %v1101
        %v1103 = vpop.f32.mrf.mxu0
        %v1104 = vpop.f32.mrf.mxu0
        %v1105 = vadd.f32 0.0, %v1104
        %v1106 = vpop.f32.mrf.mxu0
        %1107 = vmatprep.mubr.bf16.mxu0 0
        %1108 = vmatmul.mubr.bf16.gmra.mxu0 %v964
        %v1109 = vpop.f32.mrf.mxu0
        %v1110 = vadd.f32 0.0, %v1109
        %v1111 = vpop.f32.mrf.mxu0
        %v1112 = vpop.f32.mrf.mxu0
        %v1113 = vadd.f32 0.0, %v1112
        %v1114 = vpop.f32.mrf.mxu0
        %1115 = vmatprep.mubr.bf16.mxu0 0
        %1116 = vmatmul.mubr.bf16.gmra.mxu0 %v967
        %v1117 = vpop.f32.mrf.mxu0
        %v1118 = vadd.f32 0.0, %v1117
        %v1119 = vpop.f32.mrf.mxu0
        %v1120 = vpop.f32.mrf.mxu0
        %v1121 = vadd.f32 0.0, %v1120
        %v1122 = vpop.f32.mrf.mxu0
        %1123 = vmatprep.mubr.bf16.mxu0 0
        %1124 = vmatmul.mubr.bf16.gmra.mxu0 %v970
        %v1125 = vpop.f32.mrf.mxu0
        %v1126 = vadd.f32 0.0, %v1125
        %v1127 = vpop.f32.mrf.mxu0
        %v1128 = vpop.f32.mrf.mxu0
        %v1129 = vadd.f32 0.0, %v1128
        %v1130 = vpop.f32.mrf.mxu0
        %1131 = vmatprep.mubr.bf16.mxu0 0
        %1132 = vmatmul.mubr.bf16.gmra.mxu0 %v973
        %v1133 = vpop.f32.mrf.mxu0
        %v1134 = vadd.f32 0.0, %v1133
        %v1135 = vpop.f32.mrf.mxu0
        %v1136 = vpop.f32.mrf.mxu0
        %v1137 = vadd.f32 0.0, %v1136
        %v1138 = vpop.f32.mrf.mxu0
        %1139 = vdwg.mxu0
        %v1140 = vunpack.c.l.b16 %v204
        %v1141 = vunpack.c.l.b16 %v205
        %v1142 = vunpack.c.l.b16 %v207
        %v1143 = vunpack.c.l.b16 %v208
        %v1144 = vunpack.c.l.b16 %v210
        %v1145 = vunpack.c.l.b16 %v211
        %v1146 = vunpack.c.l.b16 %v213
        %v1147 = vunpack.c.l.b16 %v214
        %v1148 = vunpack.c.l.b16 %v216
        %v1149 = vunpack.c.l.b16 %v217
        %v1150 = vunpack.c.l.b16 %v219
        %v1151 = vunpack.c.l.b16 %v220
        %v1152 = vunpack.c.l.b16 %v222
        %v1153 = vunpack.c.l.b16 %v223
        %v1154 = vunpack.c.l.b16 %v225
        %v1155 = vunpack.c.l.b16 %v226
        %v1156 = vunpack.c.l.b16 %v228
        %v1157 = vunpack.c.l.b16 %v229
        %v1158 = vunpack.c.l.b16 %v231
        %v1159 = vunpack.c.l.b16 %v232
        %v1160 = vunpack.c.l.b16 %v234
        %v1161 = vunpack.c.l.b16 %v235
        %v1162 = vunpack.c.l.b16 %v237
        %v1163 = vunpack.c.l.b16 %v238
        %v1164 = vunpack.c.l.b16 %v240
        %v1165 = vunpack.c.l.b16 %v241
        %v1166 = vunpack.c.l.b16 %v243
        %v1167 = vunpack.c.l.b16 %v244
        %v1168 = vunpack.c.l.b16 %v246
        %v1169 = vunpack.c.l.b16 %v247
        %v1170 = vunpack.c.l.b16 %v249
        %v1171 = vunpack.c.l.b16 %v250
        %v1172 = vpack.c.b16 %v1141, %v1140
        %v1173 = vpack.c.b16 %v1143, %v1142
        %v1174 = vpack.c.b16 %v1145, %v1144
        %v1175 = vpack.c.b16 %v1147, %v1146
        %v1176 = vpack.c.b16 %v1149, %v1148
        %v1177 = vpack.c.b16 %v1151, %v1150
        %v1178 = vpack.c.b16 %v1153, %v1152
        %v1179 = vpack.c.b16 %v1155, %v1154
        %v1180 = vpack.c.b16 %v1157, %v1156
        %v1181 = vpack.c.b16 %v1159, %v1158
        %v1182 = vpack.c.b16 %v1161, %v1160
        %v1183 = vpack.c.b16 %v1163, %v1162
        %v1184 = vpack.c.b16 %v1165, %v1164
        %v1185 = vpack.c.b16 %v1167, %v1166
        %v1186 = vpack.c.b16 %v1169, %v1168
        %v1187 = vpack.c.b16 %v1171, %v1170
        %v1189 = vsel %vm926, %v1172, 0
        %v1192 = vsel %vm926, %v1173, 0
        %v1195 = vsel %vm926, %v1174, 0
        %v1198 = vsel %vm926, %v1175, 0
        %v1201 = vsel %vm926, %v1176, 0
        %v1204 = vsel %vm926, %v1177, 0
        %v1207 = vsel %vm926, %v1178, 0
        %v1210 = vsel %vm926, %v1179, 0
        %v1213 = vsel %vm926, %v1180, 0
        %v1216 = vsel %vm926, %v1181, 0
        %v1219 = vsel %vm926, %v1182, 0
        %v1222 = vsel %vm926, %v1183, 0
        %v1225 = vsel %vm926, %v1184, 0
        %v1228 = vsel %vm926, %v1185, 0
        %v1231 = vsel %vm926, %v1186, 0
        %v1234 = vsel %vm926, %v1187, 0
        %v1237 = vsel %vm975, %v876, 0
        %1239 = vmatprep.subr.bf16.mxu0 0
        %1240 = vmatpush1.bf16.msra.mxu0 0
        %1241 = vmatprep.subr.bf16.mxu0 0
        %1242 = vmatpush1.bf16.msra.mxu0 0
        %1243 = vmatprep.subr.bf16.mxu0 0
        %1244 = vmatpush1.bf16.msra.mxu0 0
        %1245 = vmatprep.subr.bf16.mxu0 0
        %1246 = vmatpush1.bf16.msra.mxu0 0
        %1247 = vmatprep.subr.bf16.mxu0 0
        %1248 = vmatpush1.bf16.msra.mxu0 0
        %1249 = vmatprep.subr.bf16.mxu0 0
        %1250 = vmatpush1.bf16.msra.mxu0 0
        %1251 = vmatprep.subr.bf16.mxu0 0
        %1252 = vmatpush1.bf16.msra.mxu0 0
        %1253 = vmatprep.subr.bf16.mxu0 0
        %1254 = vmatpush1.bf16.msra.mxu0 %v1237
        %1255 = vmatprep.subr.bf16.mxu0 0
        %1256 = vmatpush2.bf16.msra.mxu0 0
        %1257 = vmatprep.subr.bf16.mxu0 0
        %1258 = vmatpush2.bf16.msra.mxu0 0
        %1259 = vmatprep.subr.bf16.mxu0 0
        %1260 = vmatpush2.bf16.msra.mxu0 0
        %1261 = vmatprep.subr.bf16.mxu0 0
        %1262 = vmatpush2.bf16.msra.mxu0 0
        %1263 = vmatprep.subr.bf16.mxu0 0
        %1264 = vmatpush2.bf16.msra.mxu0 0
        %1265 = vmatprep.subr.bf16.mxu0 0
        %1266 = vmatpush2.bf16.msra.mxu0 0
        %1267 = vmatprep.subr.bf16.mxu0 0
        %1268 = vmatpush2.bf16.msra.mxu0 0
        %1269 = vmatprep.subr.bf16.mxu0 0
        %1270 = vmatpush2.bf16.msra.mxu0 0
        %1271 = vmatprep.mubr.bf16.mxu0 0
        %1272 = vmatmul.mubr.bf16.gmra.mxu0 %v1189
        %v1273 = vpop.f32.mrf.mxu0
        %v1274 = vadd.f32 %v1014, %v1273
        %v1275 = vpop.f32.mrf.mxu0
        %v1276 = vpop.f32.mrf.mxu0
        %v1277 = vadd.f32 %v1017, %v1276
        %v1278 = vpop.f32.mrf.mxu0
        %1279 = vmatprep.mubr.bf16.mxu0 0
        %1280 = vmatmul.mubr.bf16.gmra.mxu0 %v1192
        %v1281 = vpop.f32.mrf.mxu0
        %v1282 = vadd.f32 %v1022, %v1281
        %v1283 = vpop.f32.mrf.mxu0
        %v1284 = vpop.f32.mrf.mxu0
        %v1285 = vadd.f32 %v1025, %v1284
        %v1286 = vpop.f32.mrf.mxu0
        %1287 = vmatprep.mubr.bf16.mxu0 0
        %1288 = vmatmul.mubr.bf16.gmra.mxu0 %v1195
        %v1289 = vpop.f32.mrf.mxu0
        %v1290 = vadd.f32 %v1030, %v1289
        %v1291 = vpop.f32.mrf.mxu0
        %v1292 = vpop.f32.mrf.mxu0
        %v1293 = vadd.f32 %v1033, %v1292
        %v1294 = vpop.f32.mrf.mxu0
        %1295 = vmatprep.mubr.bf16.mxu0 0
        %1296 = vmatmul.mubr.bf16.gmra.mxu0 %v1198
        %v1297 = vpop.f32.mrf.mxu0
        %v1298 = vadd.f32 %v1038, %v1297
        %v1299 = vpop.f32.mrf.mxu0
        %v1300 = vpop.f32.mrf.mxu0
        %v1301 = vadd.f32 %v1041, %v1300
        %v1302 = vpop.f32.mrf.mxu0
        %1303 = vmatprep.mubr.bf16.mxu0 0
        %1304 = vmatmul.mubr.bf16.gmra.mxu0 %v1201
        %v1305 = vpop.f32.mrf.mxu0
        %v1306 = vadd.f32 %v1046, %v1305
        %v1307 = vpop.f32.mrf.mxu0
        %v1308 = vpop.f32.mrf.mxu0
        %v1309 = vadd.f32 %v1049, %v1308
        %v1310 = vpop.f32.mrf.mxu0
        %1311 = vmatprep.mubr.bf16.mxu0 0
        %1312 = vmatmul.mubr.bf16.gmra.mxu0 %v1204
        %v1313 = vpop.f32.mrf.mxu0
        %v1314 = vadd.f32 %v1054, %v1313
        %v1315 = vpop.f32.mrf.mxu0
        %v1316 = vpop.f32.mrf.mxu0
        %v1317 = vadd.f32 %v1057, %v1316
        %v1318 = vpop.f32.mrf.mxu0
        %1319 = vmatprep.mubr.bf16.mxu0 0
        %1320 = vmatmul.mubr.bf16.gmra.mxu0 %v1207
        %v1321 = vpop.f32.mrf.mxu0
        %v1322 = vadd.f32 %v1062, %v1321
        %v1323 = vpop.f32.mrf.mxu0
        %v1324 = vpop.f32.mrf.mxu0
        %v1325 = vadd.f32 %v1065, %v1324
        %v1326 = vpop.f32.mrf.mxu0
        %1327 = vmatprep.mubr.bf16.mxu0 0
        %1328 = vmatmul.mubr.bf16.gmra.mxu0 %v1210
        %v1329 = vpop.f32.mrf.mxu0
        %v1330 = vadd.f32 %v1070, %v1329
        %v1331 = vpop.f32.mrf.mxu0
        %v1332 = vpop.f32.mrf.mxu0
        %v1333 = vadd.f32 %v1073, %v1332
        %v1334 = vpop.f32.mrf.mxu0
        %1335 = vmatprep.mubr.bf16.mxu0 0
        %1336 = vmatmul.mubr.bf16.gmra.mxu0 %v1213
        %v1337 = vpop.f32.mrf.mxu0
        %v1338 = vadd.f32 %v1078, %v1337
        %v1339 = vpop.f32.mrf.mxu0
        %v1340 = vpop.f32.mrf.mxu0
        %v1341 = vadd.f32 %v1081, %v1340
        %v1342 = vpop.f32.mrf.mxu0
        %1343 = vmatprep.mubr.bf16.mxu0 0
        %1344 = vmatmul.mubr.bf16.gmra.mxu0 %v1216
        %v1345 = vpop.f32.mrf.mxu0
        %v1346 = vadd.f32 %v1086, %v1345
        %v1347 = vpop.f32.mrf.mxu0
        %v1348 = vpop.f32.mrf.mxu0
        %v1349 = vadd.f32 %v1089, %v1348
        %v1350 = vpop.f32.mrf.mxu0
        %1351 = vmatprep.mubr.bf16.mxu0 0
        %1352 = vmatmul.mubr.bf16.gmra.mxu0 %v1219
        %v1353 = vpop.f32.mrf.mxu0
        %v1354 = vadd.f32 %v1094, %v1353
        %v1355 = vpop.f32.mrf.mxu0
        %v1356 = vpop.f32.mrf.mxu0
        %v1357 = vadd.f32 %v1097, %v1356
        %v1358 = vpop.f32.mrf.mxu0
        %1359 = vmatprep.mubr.bf16.mxu0 0
        %1360 = vmatmul.mubr.bf16.gmra.mxu0 %v1222
        %v1361 = vpop.f32.mrf.mxu0
        %v1362 = vadd.f32 %v1102, %v1361
        %v1363 = vpop.f32.mrf.mxu0
        %v1364 = vpop.f32.mrf.mxu0
        %v1365 = vadd.f32 %v1105, %v1364
        %v1366 = vpop.f32.mrf.mxu0
        %1367 = vmatprep.mubr.bf16.mxu0 0
        %1368 = vmatmul.mubr.bf16.gmra.mxu0 %v1225
        %v1369 = vpop.f32.mrf.mxu0
        %v1370 = vadd.f32 %v1110, %v1369
        %v1371 = vpop.f32.mrf.mxu0
        %v1372 = vpop.f32.mrf.mxu0
        %v1373 = vadd.f32 %v1113, %v1372
        %v1374 = vpop.f32.mrf.mxu0
        %1375 = vmatprep.mubr.bf16.mxu0 0
        %1376 = vmatmul.mubr.bf16.gmra.mxu0 %v1228
        %v1377 = vpop.f32.mrf.mxu0
        %v1378 = vadd.f32 %v1118, %v1377
        %v1379 = vpop.f32.mrf.mxu0
        %v1380 = vpop.f32.mrf.mxu0
        %v1381 = vadd.f32 %v1121, %v1380
        %v1382 = vpop.f32.mrf.mxu0
        %1383 = vmatprep.mubr.bf16.mxu0 0
        %1384 = vmatmul.mubr.bf16.gmra.mxu0 %v1231
        %v1385 = vpop.f32.mrf.mxu0
        %v1386 = vadd.f32 %v1126, %v1385
        %v1387 = vpop.f32.mrf.mxu0
        %v1388 = vpop.f32.mrf.mxu0
        %v1389 = vadd.f32 %v1129, %v1388
        %v1390 = vpop.f32.mrf.mxu0
        %1391 = vmatprep.mubr.bf16.mxu0 0
        %1392 = vmatmul.mubr.bf16.gmra.mxu0 %v1234
        %v1393 = vpop.f32.mrf.mxu0
        %v1394 = vadd.f32 %v1134, %v1393
        %v1395 = vpop.f32.mrf.mxu0
        %v1396 = vpop.f32.mrf.mxu0
        %v1397 = vadd.f32 %v1137, %v1396
        %v1398 = vpop.f32.mrf.mxu0
        %1399 = vdwg.mxu0
        %v1400 = vld [vmem:[%s1 + $0x8] sm:$0xf]
        %v1401 = vunpack.c.l.b16 %v699
        %v1402 = vunpack.c.l.b16 %v702
        %v1403 = vunpack.c.l.b16 %v706
        %v1404 = vunpack.c.l.b16 %v709
        %v1405 = vunpack.c.l.b16 %v713
        %v1406 = vunpack.c.l.b16 %v716
        %v1407 = vunpack.c.l.b16 %v720
        %v1408 = vunpack.c.l.b16 %v723
        %v1409 = vunpack.c.l.b16 %v727
        %v1410 = vunpack.c.l.b16 %v730
        %v1411 = vunpack.c.l.b16 %v734
        %v1412 = vunpack.c.l.b16 %v737
        %v1413 = vunpack.c.l.b16 %v741
        %v1414 = vunpack.c.l.b16 %v744
        %v1415 = vunpack.c.l.b16 %v748
        %v1416 = vunpack.c.l.b16 %v751
        %v1417 = vunpack.c.l.b16 %v755
        %v1418 = vunpack.c.l.b16 %v758
        %v1419 = vunpack.c.l.b16 %v762
        %v1420 = vunpack.c.l.b16 %v765
        %v1421 = vunpack.c.l.b16 %v769
        %v1422 = vunpack.c.l.b16 %v772
        %v1423 = vunpack.c.l.b16 %v776
        %v1424 = vunpack.c.l.b16 %v779
        %v1425 = vunpack.c.l.b16 %v783
        %v1426 = vunpack.c.l.b16 %v786
        %v1427 = vunpack.c.l.b16 %v790
        %v1428 = vunpack.c.l.b16 %v793
        %v1429 = vunpack.c.l.b16 %v797
        %v1430 = vunpack.c.l.b16 %v800
        %v1431 = vunpack.c.l.b16 %v804
        %v1432 = vunpack.c.l.b16 %v807
        %v1433 = vpack.c.b16 %v1402, %v1401
        %v1434 = vpack.c.b16 %v1404, %v1403
        %v1435 = vpack.c.b16 %v1406, %v1405
        %v1436 = vpack.c.b16 %v1408, %v1407
        %v1437 = vpack.c.b16 %v1410, %v1409
        %v1438 = vpack.c.b16 %v1412, %v1411
        %v1439 = vpack.c.b16 %v1414, %v1413
        %v1440 = vpack.c.b16 %v1416, %v1415
        %v1441 = vpack.c.b16 %v1418, %v1417
        %v1442 = vpack.c.b16 %v1420, %v1419
        %v1443 = vpack.c.b16 %v1422, %v1421
        %v1444 = vpack.c.b16 %v1424, %v1423
        %v1445 = vpack.c.b16 %v1426, %v1425
        %v1446 = vpack.c.b16 %v1428, %v1427
        %v1447 = vpack.c.b16 %v1430, %v1429
        %v1448 = vpack.c.b16 %v1432, %v1431
        %v1450 = vsel %vm926, %v1433, 0
        %v1453 = vsel %vm926, %v1434, 0
        %v1456 = vsel %vm926, %v1435, 0
        %v1459 = vsel %vm926, %v1436, 0
        %v1462 = vsel %vm926, %v1437, 0
        %v1465 = vsel %vm926, %v1438, 0
        %v1468 = vsel %vm926, %v1439, 0
        %v1471 = vsel %vm926, %v1440, 0
        %v1474 = vsel %vm926, %v1441, 0
        %v1477 = vsel %vm926, %v1442, 0
        %v1480 = vsel %vm926, %v1443, 0
        %v1483 = vsel %vm926, %v1444, 0
        %v1486 = vsel %vm926, %v1445, 0
        %v1489 = vsel %vm926, %v1446, 0
        %v1492 = vsel %vm926, %v1447, 0
        %v1495 = vsel %vm926, %v1448, 0
        %v1498 = vsel %vm975, %v1400, 0
        %1500 = vmatprep.subr.bf16.mxu0 0
        %1501 = vmatpush1.bf16.msra.mxu0 0
        %1502 = vmatprep.subr.bf16.mxu0 0
        %1503 = vmatpush1.bf16.msra.mxu0 0
        %1504 = vmatprep.subr.bf16.mxu0 0
        %1505 = vmatpush1.bf16.msra.mxu0 0
        %1506 = vmatprep.subr.bf16.mxu0 0
        %1507 = vmatpush1.bf16.msra.mxu0 0
        %1508 = vmatprep.subr.bf16.mxu0 0
        %1509 = vmatpush1.bf16.msra.mxu0 0
        %1510 = vmatprep.subr.bf16.mxu0 0
        %1511 = vmatpush1.bf16.msra.mxu0 0
        %1512 = vmatprep.subr.bf16.mxu0 0
        %1513 = vmatpush1.bf16.msra.mxu0 0
        %1514 = vmatprep.subr.bf16.mxu0 0
        %1515 = vmatpush1.bf16.msra.mxu0 %v1498
        %1516 = vmatprep.subr.bf16.mxu0 0
        %1517 = vmatpush2.bf16.msra.mxu0 0
        %1518 = vmatprep.subr.bf16.mxu0 0
        %1519 = vmatpush2.bf16.msra.mxu0 0
        %1520 = vmatprep.subr.bf16.mxu0 0
        %1521 = vmatpush2.bf16.msra.mxu0 0
        %1522 = vmatprep.subr.bf16.mxu0 0
        %1523 = vmatpush2.bf16.msra.mxu0 0
        %1524 = vmatprep.subr.bf16.mxu0 0
        %1525 = vmatpush2.bf16.msra.mxu0 0
        %1526 = vmatprep.subr.bf16.mxu0 0
        %1527 = vmatpush2.bf16.msra.mxu0 0
        %1528 = vmatprep.subr.bf16.mxu0 0
        %1529 = vmatpush2.bf16.msra.mxu0 0
        %1530 = vmatprep.subr.bf16.mxu0 0
        %1531 = vmatpush2.bf16.msra.mxu0 0
        %1532 = vmatprep.mubr.bf16.mxu0 0
        %1533 = vmatmul.mubr.bf16.gmra.mxu0 %v1450
        %v1534 = vpop.f32.mrf.mxu0
        %v1535 = vadd.f32 0.0, %v1534
        %v1536 = vpop.f32.mrf.mxu0
        %v1537 = vpop.f32.mrf.mxu0
        %v1538 = vadd.f32 0.0, %v1537
        %v1539 = vpop.f32.mrf.mxu0
        %1540 = vmatprep.mubr.bf16.mxu0 0
        %1541 = vmatmul.mubr.bf16.gmra.mxu0 %v1453
        %v1542 = vpop.f32.mrf.mxu0
        %v1543 = vadd.f32 0.0, %v1542
        %v1544 = vpop.f32.mrf.mxu0
        %v1545 = vpop.f32.mrf.mxu0
        %v1546 = vadd.f32 0.0, %v1545
        %v1547 = vpop.f32.mrf.mxu0
        %1548 = vmatprep.mubr.bf16.mxu0 0
        %1549 = vmatmul.mubr.bf16.gmra.mxu0 %v1456
        %v1550 = vpop.f32.mrf.mxu0
        %v1551 = vadd.f32 0.0, %v1550
        %v1552 = vpop.f32.mrf.mxu0
        %v1553 = vpop.f32.mrf.mxu0
        %v1554 = vadd.f32 0.0, %v1553
        %v1555 = vpop.f32.mrf.mxu0
        %1556 = vmatprep.mubr.bf16.mxu0 0
        %1557 = vmatmul.mubr.bf16.gmra.mxu0 %v1459
        %v1558 = vpop.f32.mrf.mxu0
        %v1559 = vadd.f32 0.0, %v1558
        %v1560 = vpop.f32.mrf.mxu0
        %v1561 = vpop.f32.mrf.mxu0
        %v1562 = vadd.f32 0.0, %v1561
        %v1563 = vpop.f32.mrf.mxu0
        %1564 = vmatprep.mubr.bf16.mxu0 0
        %1565 = vmatmul.mubr.bf16.gmra.mxu0 %v1462
        %v1566 = vpop.f32.mrf.mxu0
        %v1567 = vadd.f32 0.0, %v1566
        %v1568 = vpop.f32.mrf.mxu0
        %v1569 = vpop.f32.mrf.mxu0
        %v1570 = vadd.f32 0.0, %v1569
        %v1571 = vpop.f32.mrf.mxu0
        %1572 = vmatprep.mubr.bf16.mxu0 0
        %1573 = vmatmul.mubr.bf16.gmra.mxu0 %v1465
        %v1574 = vpop.f32.mrf.mxu0
        %v1575 = vadd.f32 0.0, %v1574
        %v1576 = vpop.f32.mrf.mxu0
        %v1577 = vpop.f32.mrf.mxu0
        %v1578 = vadd.f32 0.0, %v1577
        %v1579 = vpop.f32.mrf.mxu0
        %1580 = vmatprep.mubr.bf16.mxu0 0
        %1581 = vmatmul.mubr.bf16.gmra.mxu0 %v1468
        %v1582 = vpop.f32.mrf.mxu0
        %v1583 = vadd.f32 0.0, %v1582
        %v1584 = vpop.f32.mrf.mxu0
        %v1585 = vpop.f32.mrf.mxu0
        %v1586 = vadd.f32 0.0, %v1585
        %v1587 = vpop.f32.mrf.mxu0
        %1588 = vmatprep.mubr.bf16.mxu0 0
        %1589 = vmatmul.mubr.bf16.gmra.mxu0 %v1471
        %v1590 = vpop.f32.mrf.mxu0
        %v1591 = vadd.f32 0.0, %v1590
        %v1592 = vpop.f32.mrf.mxu0
        %v1593 = vpop.f32.mrf.mxu0
        %v1594 = vadd.f32 0.0, %v1593
        %v1595 = vpop.f32.mrf.mxu0
        %1596 = vmatprep.mubr.bf16.mxu0 0
        %1597 = vmatmul.mubr.bf16.gmra.mxu0 %v1474
        %v1598 = vpop.f32.mrf.mxu0
        %v1599 = vadd.f32 0.0, %v1598
        %v1600 = vpop.f32.mrf.mxu0
        %v1601 = vpop.f32.mrf.mxu0
        %v1602 = vadd.f32 0.0, %v1601
        %v1603 = vpop.f32.mrf.mxu0
        %1604 = vmatprep.mubr.bf16.mxu0 0
        %1605 = vmatmul.mubr.bf16.gmra.mxu0 %v1477
        %v1606 = vpop.f32.mrf.mxu0
        %v1607 = vadd.f32 0.0, %v1606
        %v1608 = vpop.f32.mrf.mxu0
        %v1609 = vpop.f32.mrf.mxu0
        %v1610 = vadd.f32 0.0, %v1609
        %v1611 = vpop.f32.mrf.mxu0
        %1612 = vmatprep.mubr.bf16.mxu0 0
        %1613 = vmatmul.mubr.bf16.gmra.mxu0 %v1480
        %v1614 = vpop.f32.mrf.mxu0
        %v1615 = vadd.f32 0.0, %v1614
        %v1616 = vpop.f32.mrf.mxu0
        %v1617 = vpop.f32.mrf.mxu0
        %v1618 = vadd.f32 0.0, %v1617
        %v1619 = vpop.f32.mrf.mxu0
        %1620 = vmatprep.mubr.bf16.mxu0 0
        %1621 = vmatmul.mubr.bf16.gmra.mxu0 %v1483
        %v1622 = vpop.f32.mrf.mxu0
        %v1623 = vadd.f32 0.0, %v1622
        %v1624 = vpop.f32.mrf.mxu0
        %v1625 = vpop.f32.mrf.mxu0
        %v1626 = vadd.f32 0.0, %v1625
        %v1627 = vpop.f32.mrf.mxu0
        %1628 = vmatprep.mubr.bf16.mxu0 0
        %1629 = vmatmul.mubr.bf16.gmra.mxu0 %v1486
        %v1630 = vpop.f32.mrf.mxu0
        %v1631 = vadd.f32 0.0, %v1630
        %v1632 = vpop.f32.mrf.mxu0
        %v1633 = vpop.f32.mrf.mxu0
        %v1634 = vadd.f32 0.0, %v1633
        %v1635 = vpop.f32.mrf.mxu0
        %1636 = vmatprep.mubr.bf16.mxu0 0
        %1637 = vmatmul.mubr.bf16.gmra.mxu0 %v1489
        %v1638 = vpop.f32.mrf.mxu0
        %v1639 = vadd.f32 0.0, %v1638
        %v1640 = vpop.f32.mrf.mxu0
        %v1641 = vpop.f32.mrf.mxu0
        %v1642 = vadd.f32 0.0, %v1641
        %v1643 = vpop.f32.mrf.mxu0
        %1644 = vmatprep.mubr.bf16.mxu0 0
        %1645 = vmatmul.mubr.bf16.gmra.mxu0 %v1492
        %v1646 = vpop.f32.mrf.mxu0
        %v1647 = vadd.f32 0.0, %v1646
        %v1648 = vpop.f32.mrf.mxu0
        %v1649 = vpop.f32.mrf.mxu0
        %v1650 = vadd.f32 0.0, %v1649
        %v1651 = vpop.f32.mrf.mxu0
        %1652 = vmatprep.mubr.bf16.mxu0 0
        %1653 = vmatmul.mubr.bf16.gmra.mxu0 %v1495
        %v1654 = vpop.f32.mrf.mxu0
        %v1655 = vadd.f32 0.0, %v1654
        %v1656 = vpop.f32.mrf.mxu0
        %v1657 = vpop.f32.mrf.mxu0
        %v1658 = vadd.f32 0.0, %v1657
        %v1659 = vpop.f32.mrf.mxu0
        %1660 = vdwg.mxu0
        %v1661 = vadd.f32 %v1274, %v1535
        %v1662 = vadd.f32 %v1277, %v1538
        %v1663 = vadd.f32 %v1282, %v1543
        %v1664 = vadd.f32 %v1285, %v1546
        %v1665 = vadd.f32 %v1290, %v1551
        %v1666 = vadd.f32 %v1293, %v1554
        %v1667 = vadd.f32 %v1298, %v1559
        %v1668 = vadd.f32 %v1301, %v1562
        %v1669 = vadd.f32 %v1306, %v1567
        %v1670 = vadd.f32 %v1309, %v1570
        %v1671 = vadd.f32 %v1314, %v1575
        %v1672 = vadd.f32 %v1317, %v1578
        %v1673 = vadd.f32 %v1322, %v1583
        %v1674 = vadd.f32 %v1325, %v1586
        %v1675 = vadd.f32 %v1330, %v1591
        %v1676 = vadd.f32 %v1333, %v1594
        %v1677 = vadd.f32 %v1338, %v1599
        %v1678 = vadd.f32 %v1341, %v1602
        %v1679 = vadd.f32 %v1346, %v1607
        %v1680 = vadd.f32 %v1349, %v1610
        %v1681 = vadd.f32 %v1354, %v1615
        %v1682 = vadd.f32 %v1357, %v1618
        %v1683 = vadd.f32 %v1362, %v1623
        %v1684 = vadd.f32 %v1365, %v1626
        %v1685 = vadd.f32 %v1370, %v1631
        %v1686 = vadd.f32 %v1373, %v1634
        %v1687 = vadd.f32 %v1378, %v1639
        %v1688 = vadd.f32 %v1381, %v1642
        %v1689 = vadd.f32 %v1386, %v1647
        %v1690 = vadd.f32 %v1389, %v1650
        %v1691 = vadd.f32 %v1394, %v1655
        %v1692 = vadd.f32 %v1397, %v1658
        %v1693 = vld [vmem:[%s1 + $0xc] sm:$0xf]
        %v1694 = vunpack.c.l.b16 %v252
        %v1695 = vunpack.c.l.b16 %v253
        %v1696 = vpack.c.b16 %v1695, %v1694
        %v1698 = vsel %vm926, %v1696, 0
        %v1701 = vsel %vm975, %v1693, 0
        %1703 = vmatprep.subr.bf16.mxu0 0
        %1704 = vmatpush1.bf16.msra.mxu0 0
        %1705 = vmatprep.subr.bf16.mxu0 0
        %1706 = vmatpush1.bf16.msra.mxu0 0
        %1707 = vmatprep.subr.bf16.mxu0 0
        %1708 = vmatpush1.bf16.msra.mxu0 0
        %1709 = vmatprep.subr.bf16.mxu0 0
        %1710 = vmatpush1.bf16.msra.mxu0 0
        %1711 = vmatprep.subr.bf16.mxu0 0
        %1712 = vmatpush1.bf16.msra.mxu0 0
        %1713 = vmatprep.subr.bf16.mxu0 0
        %1714 = vmatpush1.bf16.msra.mxu0 0
        %1715 = vmatprep.subr.bf16.mxu0 0
        %1716 = vmatpush1.bf16.msra.mxu0 0
        %1717 = vmatprep.subr.bf16.mxu0 0
        %1718 = vmatpush1.bf16.msra.mxu0 %v1701
        %1719 = vmatprep.subr.bf16.mxu0 0
        %1720 = vmatpush2.bf16.msra.mxu0 0
        %1721 = vmatprep.subr.bf16.mxu0 0
        %1722 = vmatpush2.bf16.msra.mxu0 0
        %1723 = vmatprep.subr.bf16.mxu0 0
        %1724 = vmatpush2.bf16.msra.mxu0 0
        %1725 = vmatprep.subr.bf16.mxu0 0
        %1726 = vmatpush2.bf16.msra.mxu0 0
        %1727 = vmatprep.subr.bf16.mxu0 0
        %1728 = vmatpush2.bf16.msra.mxu0 0
        %1729 = vmatprep.subr.bf16.mxu0 0
        %1730 = vmatpush2.bf16.msra.mxu0 0
        %1731 = vmatprep.subr.bf16.mxu0 0
        %1732 = vmatpush2.bf16.msra.mxu0 0
        %1733 = vmatprep.subr.bf16.mxu0 0
        %1734 = vmatpush2.bf16.msra.mxu0 0
        %1735 = vmatprep.mubr.bf16.mxu0 0
        %1736 = vmatmul.mubr.bf16.gmra.mxu0 %v1192
        %v1737 = vpop.f32.mrf.mxu0
        %v1738 = vadd.f32 0.0, %v1737
        %v1739 = vpop.f32.mrf.mxu0
        %v1740 = vpop.f32.mrf.mxu0
        %v1741 = vadd.f32 0.0, %v1740
        %v1742 = vpop.f32.mrf.mxu0
        %1743 = vmatprep.mubr.bf16.mxu0 0
        %1744 = vmatmul.mubr.bf16.gmra.mxu0 %v1195
        %v1745 = vpop.f32.mrf.mxu0
        %v1746 = vadd.f32 0.0, %v1745
        %v1747 = vpop.f32.mrf.mxu0
        %v1748 = vpop.f32.mrf.mxu0
        %v1749 = vadd.f32 0.0, %v1748
        %v1750 = vpop.f32.mrf.mxu0
        %1751 = vmatprep.mubr.bf16.mxu0 0
        %1752 = vmatmul.mubr.bf16.gmra.mxu0 %v1198
        %v1753 = vpop.f32.mrf.mxu0
        %v1754 = vadd.f32 0.0, %v1753
        %v1755 = vpop.f32.mrf.mxu0
        %v1756 = vpop.f32.mrf.mxu0
        %v1757 = vadd.f32 0.0, %v1756
        %v1758 = vpop.f32.mrf.mxu0
        %1759 = vmatprep.mubr.bf16.mxu0 0
        %1760 = vmatmul.mubr.bf16.gmra.mxu0 %v1201
        %v1761 = vpop.f32.mrf.mxu0
        %v1762 = vadd.f32 0.0, %v1761
        %v1763 = vpop.f32.mrf.mxu0
        %v1764 = vpop.f32.mrf.mxu0
        %v1765 = vadd.f32 0.0, %v1764
        %v1766 = vpop.f32.mrf.mxu0
        %1767 = vmatprep.mubr.bf16.mxu0 0
        %1768 = vmatmul.mubr.bf16.gmra.mxu0 %v1204
        %v1769 = vpop.f32.mrf.mxu0
        %v1770 = vadd.f32 0.0, %v1769
        %v1771 = vpop.f32.mrf.mxu0
        %v1772 = vpop.f32.mrf.mxu0
        %v1773 = vadd.f32 0.0, %v1772
        %v1774 = vpop.f32.mrf.mxu0
        %1775 = vmatprep.mubr.bf16.mxu0 0
        %1776 = vmatmul.mubr.bf16.gmra.mxu0 %v1207
        %v1777 = vpop.f32.mrf.mxu0
        %v1778 = vadd.f32 0.0, %v1777
        %v1779 = vpop.f32.mrf.mxu0
        %v1780 = vpop.f32.mrf.mxu0
        %v1781 = vadd.f32 0.0, %v1780
        %v1782 = vpop.f32.mrf.mxu0
        %1783 = vmatprep.mubr.bf16.mxu0 0
        %1784 = vmatmul.mubr.bf16.gmra.mxu0 %v1210
        %v1785 = vpop.f32.mrf.mxu0
        %v1786 = vadd.f32 0.0, %v1785
        %v1787 = vpop.f32.mrf.mxu0
        %v1788 = vpop.f32.mrf.mxu0
        %v1789 = vadd.f32 0.0, %v1788
        %v1790 = vpop.f32.mrf.mxu0
        %1791 = vmatprep.mubr.bf16.mxu0 0
        %1792 = vmatmul.mubr.bf16.gmra.mxu0 %v1213
        %v1793 = vpop.f32.mrf.mxu0
        %v1794 = vadd.f32 0.0, %v1793
        %v1795 = vpop.f32.mrf.mxu0
        %v1796 = vpop.f32.mrf.mxu0
        %v1797 = vadd.f32 0.0, %v1796
        %v1798 = vpop.f32.mrf.mxu0
        %1799 = vmatprep.mubr.bf16.mxu0 0
        %1800 = vmatmul.mubr.bf16.gmra.mxu0 %v1216
        %v1801 = vpop.f32.mrf.mxu0
        %v1802 = vadd.f32 0.0, %v1801
        %v1803 = vpop.f32.mrf.mxu0
        %v1804 = vpop.f32.mrf.mxu0
        %v1805 = vadd.f32 0.0, %v1804
        %v1806 = vpop.f32.mrf.mxu0
        %1807 = vmatprep.mubr.bf16.mxu0 0
        %1808 = vmatmul.mubr.bf16.gmra.mxu0 %v1219
        %v1809 = vpop.f32.mrf.mxu0
        %v1810 = vadd.f32 0.0, %v1809
        %v1811 = vpop.f32.mrf.mxu0
        %v1812 = vpop.f32.mrf.mxu0
        %v1813 = vadd.f32 0.0, %v1812
        %v1814 = vpop.f32.mrf.mxu0
        %1815 = vmatprep.mubr.bf16.mxu0 0
        %1816 = vmatmul.mubr.bf16.gmra.mxu0 %v1222
        %v1817 = vpop.f32.mrf.mxu0
        %v1818 = vadd.f32 0.0, %v1817
        %v1819 = vpop.f32.mrf.mxu0
        %v1820 = vpop.f32.mrf.mxu0
        %v1821 = vadd.f32 0.0, %v1820
        %v1822 = vpop.f32.mrf.mxu0
        %1823 = vmatprep.mubr.bf16.mxu0 0
        %1824 = vmatmul.mubr.bf16.gmra.mxu0 %v1225
        %v1825 = vpop.f32.mrf.mxu0
        %v1826 = vadd.f32 0.0, %v1825
        %v1827 = vpop.f32.mrf.mxu0
        %v1828 = vpop.f32.mrf.mxu0
        %v1829 = vadd.f32 0.0, %v1828
        %v1830 = vpop.f32.mrf.mxu0
        %1831 = vmatprep.mubr.bf16.mxu0 0
        %1832 = vmatmul.mubr.bf16.gmra.mxu0 %v1228
        %v1833 = vpop.f32.mrf.mxu0
        %v1834 = vadd.f32 0.0, %v1833
        %v1835 = vpop.f32.mrf.mxu0
        %v1836 = vpop.f32.mrf.mxu0
        %v1837 = vadd.f32 0.0, %v1836
        %v1838 = vpop.f32.mrf.mxu0
        %1839 = vmatprep.mubr.bf16.mxu0 0
        %1840 = vmatmul.mubr.bf16.gmra.mxu0 %v1231
        %v1841 = vpop.f32.mrf.mxu0
        %v1842 = vadd.f32 0.0, %v1841
        %v1843 = vpop.f32.mrf.mxu0
        %v1844 = vpop.f32.mrf.mxu0
        %v1845 = vadd.f32 0.0, %v1844
        %v1846 = vpop.f32.mrf.mxu0
        %1847 = vmatprep.mubr.bf16.mxu0 0
        %1848 = vmatmul.mubr.bf16.gmra.mxu0 %v1234
        %v1849 = vpop.f32.mrf.mxu0
        %v1850 = vadd.f32 0.0, %v1849
        %v1851 = vpop.f32.mrf.mxu0
        %v1852 = vpop.f32.mrf.mxu0
        %v1853 = vadd.f32 0.0, %v1852
        %v1854 = vpop.f32.mrf.mxu0
        %1855 = vmatprep.mubr.bf16.mxu0 0
        %1856 = vmatmul.mubr.bf16.gmra.mxu0 %v1698
        %v1857 = vpop.f32.mrf.mxu0
        %v1858 = vadd.f32 0.0, %v1857
        %v1859 = vpop.f32.mrf.mxu0
        %v1860 = vpop.f32.mrf.mxu0
        %v1861 = vadd.f32 0.0, %v1860
        %v1862 = vpop.f32.mrf.mxu0
        %1863 = vdwg.mxu0
        %v1864 = vadd.f32 %v1661, %v1738
        %v1865 = vadd.f32 %v1662, %v1741
        %v1866 = vadd.f32 %v1663, %v1746
        %v1867 = vadd.f32 %v1664, %v1749
        %v1868 = vadd.f32 %v1665, %v1754
        %v1869 = vadd.f32 %v1666, %v1757
        %v1870 = vadd.f32 %v1667, %v1762
        %v1871 = vadd.f32 %v1668, %v1765
        %v1872 = vadd.f32 %v1669, %v1770
        %v1873 = vadd.f32 %v1670, %v1773
        %v1874 = vadd.f32 %v1671, %v1778
        %v1875 = vadd.f32 %v1672, %v1781
        %v1876 = vadd.f32 %v1673, %v1786
        %v1877 = vadd.f32 %v1674, %v1789
        %v1878 = vadd.f32 %v1675, %v1794
        %v1879 = vadd.f32 %v1676, %v1797
        %v1880 = vadd.f32 %v1677, %v1802
        %v1881 = vadd.f32 %v1678, %v1805
        %v1882 = vadd.f32 %v1679, %v1810
        %v1883 = vadd.f32 %v1680, %v1813
        %v1884 = vadd.f32 %v1681, %v1818
        %v1885 = vadd.f32 %v1682, %v1821
        %v1886 = vadd.f32 %v1683, %v1826
        %v1887 = vadd.f32 %v1684, %v1829
        %v1888 = vadd.f32 %v1685, %v1834
        %v1889 = vadd.f32 %v1686, %v1837
        %v1890 = vadd.f32 %v1687, %v1842
        %v1891 = vadd.f32 %v1688, %v1845
        %v1892 = vadd.f32 %v1689, %v1850
        %v1893 = vadd.f32 %v1690, %v1853
        %v1894 = vadd.f32 %v1691, %v1858
        %v1895 = vadd.f32 %v1692, %v1861
        %v1896 = vld [vmem:[%s1 + $0x10] sm:$0xf]
        %v1897 = vunpack.c.l.b16 %v821
        %v1898 = vunpack.c.l.b16 %v831
        %v1899 = vpack.c.b16 %v1898, %v1897
        %v1901 = vsel %vm926, %v1899, 0
        %v1904 = vsel %vm975, %v1896, 0
        %1906 = vmatprep.subr.bf16.mxu0 0
        %1907 = vmatpush1.bf16.msra.mxu0 0
        %1908 = vmatprep.subr.bf16.mxu0 0
        %1909 = vmatpush1.bf16.msra.mxu0 0
        %1910 = vmatprep.subr.bf16.mxu0 0
        %1911 = vmatpush1.bf16.msra.mxu0 0
        %1912 = vmatprep.subr.bf16.mxu0 0
        %1913 = vmatpush1.bf16.msra.mxu0 0
        %1914 = vmatprep.subr.bf16.mxu0 0
        %1915 = vmatpush1.bf16.msra.mxu0 0
        %1916 = vmatprep.subr.bf16.mxu0 0
        %1917 = vmatpush1.bf16.msra.mxu0 0
        %1918 = vmatprep.subr.bf16.mxu0 0
        %1919 = vmatpush1.bf16.msra.mxu0 0
        %1920 = vmatprep.subr.bf16.mxu0 0
        %1921 = vmatpush1.bf16.msra.mxu0 %v1904
        %1922 = vmatprep.subr.bf16.mxu0 0
        %1923 = vmatpush2.bf16.msra.mxu0 0
        %1924 = vmatprep.subr.bf16.mxu0 0
        %1925 = vmatpush2.bf16.msra.mxu0 0
        %1926 = vmatprep.subr.bf16.mxu0 0
        %1927 = vmatpush2.bf16.msra.mxu0 0
        %1928 = vmatprep.subr.bf16.mxu0 0
        %1929 = vmatpush2.bf16.msra.mxu0 0
        %1930 = vmatprep.subr.bf16.mxu0 0
        %1931 = vmatpush2.bf16.msra.mxu0 0
        %1932 = vmatprep.subr.bf16.mxu0 0
        %1933 = vmatpush2.bf16.msra.mxu0 0
        %1934 = vmatprep.subr.bf16.mxu0 0
        %1935 = vmatpush2.bf16.msra.mxu0 0
        %1936 = vmatprep.subr.bf16.mxu0 0
        %1937 = vmatpush2.bf16.msra.mxu0 0
        %1938 = vmatprep.mubr.bf16.mxu0 0
        %1939 = vmatmul.mubr.bf16.gmra.mxu0 %v931
        %v1940 = vpop.f32.mrf.mxu0
        %v1941 = vadd.f32 0.0, %v1940
        %v1942 = vpop.f32.mrf.mxu0
        %v1943 = vpop.f32.mrf.mxu0
        %v1944 = vadd.f32 0.0, %v1943
        %v1945 = vpop.f32.mrf.mxu0
        %1946 = vmatprep.mubr.bf16.mxu0 0
        %1947 = vmatmul.mubr.bf16.gmra.mxu0 %v934
        %v1948 = vpop.f32.mrf.mxu0
        %v1949 = vadd.f32 0.0, %v1948
        %v1950 = vpop.f32.mrf.mxu0
        %v1951 = vpop.f32.mrf.mxu0
        %v1952 = vadd.f32 0.0, %v1951
        %v1953 = vpop.f32.mrf.mxu0
        %1954 = vmatprep.mubr.bf16.mxu0 0
        %1955 = vmatmul.mubr.bf16.gmra.mxu0 %v937
        %v1956 = vpop.f32.mrf.mxu0
        %v1957 = vadd.f32 0.0, %v1956
        %v1958 = vpop.f32.mrf.mxu0
        %v1959 = vpop.f32.mrf.mxu0
        %v1960 = vadd.f32 0.0, %v1959
        %v1961 = vpop.f32.mrf.mxu0
        %1962 = vmatprep.mubr.bf16.mxu0 0
        %1963 = vmatmul.mubr.bf16.gmra.mxu0 %v940
        %v1964 = vpop.f32.mrf.mxu0
        %v1965 = vadd.f32 0.0, %v1964
        %v1966 = vpop.f32.mrf.mxu0
        %v1967 = vpop.f32.mrf.mxu0
        %v1968 = vadd.f32 0.0, %v1967
        %v1969 = vpop.f32.mrf.mxu0
        %1970 = vmatprep.mubr.bf16.mxu0 0
        %1971 = vmatmul.mubr.bf16.gmra.mxu0 %v943
        %v1972 = vpop.f32.mrf.mxu0
        %v1973 = vadd.f32 0.0, %v1972
        %v1974 = vpop.f32.mrf.mxu0
        %v1975 = vpop.f32.mrf.mxu0
        %v1976 = vadd.f32 0.0, %v1975
        %v1977 = vpop.f32.mrf.mxu0
        %1978 = vmatprep.mubr.bf16.mxu0 0
        %1979 = vmatmul.mubr.bf16.gmra.mxu0 %v946
        %v1980 = vpop.f32.mrf.mxu0
        %v1981 = vadd.f32 0.0, %v1980
        %v1982 = vpop.f32.mrf.mxu0
        %v1983 = vpop.f32.mrf.mxu0
        %v1984 = vadd.f32 0.0, %v1983
        %v1985 = vpop.f32.mrf.mxu0
        %1986 = vmatprep.mubr.bf16.mxu0 0
        %1987 = vmatmul.mubr.bf16.gmra.mxu0 %v949
        %v1988 = vpop.f32.mrf.mxu0
        %v1989 = vadd.f32 0.0, %v1988
        %v1990 = vpop.f32.mrf.mxu0
        %v1991 = vpop.f32.mrf.mxu0
        %v1992 = vadd.f32 0.0, %v1991
        %v1993 = vpop.f32.mrf.mxu0
        %1994 = vmatprep.mubr.bf16.mxu0 0
        %1995 = vmatmul.mubr.bf16.gmra.mxu0 %v952
        %v1996 = vpop.f32.mrf.mxu0
        %v1997 = vadd.f32 0.0, %v1996
        %v1998 = vpop.f32.mrf.mxu0
        %v1999 = vpop.f32.mrf.mxu0
        %v2000 = vadd.f32 0.0, %v1999
        %v2001 = vpop.f32.mrf.mxu0
        %2002 = vmatprep.mubr.bf16.mxu0 0
        %2003 = vmatmul.mubr.bf16.gmra.mxu0 %v955
        %v2004 = vpop.f32.mrf.mxu0
        %v2005 = vadd.f32 0.0, %v2004
        %v2006 = vpop.f32.mrf.mxu0
        %v2007 = vpop.f32.mrf.mxu0
        %v2008 = vadd.f32 0.0, %v2007
        %v2009 = vpop.f32.mrf.mxu0
        %2010 = vmatprep.mubr.bf16.mxu0 0
        %2011 = vmatmul.mubr.bf16.gmra.mxu0 %v958
        %v2012 = vpop.f32.mrf.mxu0
        %v2013 = vadd.f32 0.0, %v2012
        %v2014 = vpop.f32.mrf.mxu0
        %v2015 = vpop.f32.mrf.mxu0
        %v2016 = vadd.f32 0.0, %v2015
        %v2017 = vpop.f32.mrf.mxu0
        %2018 = vmatprep.mubr.bf16.mxu0 0
        %2019 = vmatmul.mubr.bf16.gmra.mxu0 %v961
        %v2020 = vpop.f32.mrf.mxu0
        %v2021 = vadd.f32 0.0, %v2020
        %v2022 = vpop.f32.mrf.mxu0
        %v2023 = vpop.f32.mrf.mxu0
        %v2024 = vadd.f32 0.0, %v2023
        %v2025 = vpop.f32.mrf.mxu0
        %2026 = vmatprep.mubr.bf16.mxu0 0
        %2027 = vmatmul.mubr.bf16.gmra.mxu0 %v964
        %v2028 = vpop.f32.mrf.mxu0
        %v2029 = vadd.f32 0.0, %v2028
        %v2030 = vpop.f32.mrf.mxu0
        %v2031 = vpop.f32.mrf.mxu0
        %v2032 = vadd.f32 0.0, %v2031
        %v2033 = vpop.f32.mrf.mxu0
        %2034 = vmatprep.mubr.bf16.mxu0 0
        %2035 = vmatmul.mubr.bf16.gmra.mxu0 %v967
        %v2036 = vpop.f32.mrf.mxu0
        %v2037 = vadd.f32 0.0, %v2036
        %v2038 = vpop.f32.mrf.mxu0
        %v2039 = vpop.f32.mrf.mxu0
        %v2040 = vadd.f32 0.0, %v2039
        %v2041 = vpop.f32.mrf.mxu0
        %2042 = vmatprep.mubr.bf16.mxu0 0
        %2043 = vmatmul.mubr.bf16.gmra.mxu0 %v970
        %v2044 = vpop.f32.mrf.mxu0
        %v2045 = vadd.f32 0.0, %v2044
        %v2046 = vpop.f32.mrf.mxu0
        %v2047 = vpop.f32.mrf.mxu0
        %v2048 = vadd.f32 0.0, %v2047
        %v2049 = vpop.f32.mrf.mxu0
        %2050 = vmatprep.mubr.bf16.mxu0 0
        %2051 = vmatmul.mubr.bf16.gmra.mxu0 %v973
        %v2052 = vpop.f32.mrf.mxu0
        %v2053 = vadd.f32 0.0, %v2052
        %v2054 = vpop.f32.mrf.mxu0
        %v2055 = vpop.f32.mrf.mxu0
        %v2056 = vadd.f32 0.0, %v2055
        %v2057 = vpop.f32.mrf.mxu0
        %2058 = vmatprep.mubr.bf16.mxu0 0
        %2059 = vmatmul.mubr.bf16.gmra.mxu0 %v1901
        %v2060 = vpop.f32.mrf.mxu0
        %v2061 = vadd.f32 0.0, %v2060
        %v2062 = vpop.f32.mrf.mxu0
        %v2063 = vpop.f32.mrf.mxu0
        %v2064 = vadd.f32 0.0, %v2063
        %v2065 = vpop.f32.mrf.mxu0
        %2066 = vdwg.mxu0
        %v2067 = vadd.f32 %v1864, %v1941
        %v2068 = vadd.f32 %v1865, %v1944
        %v2069 = vadd.f32 %v1866, %v1949
        %v2070 = vadd.f32 %v1867, %v1952
        %v2071 = vadd.f32 %v1868, %v1957
        %v2072 = vadd.f32 %v1869, %v1960
        %v2073 = vadd.f32 %v1870, %v1965
        %v2074 = vadd.f32 %v1871, %v1968
        %v2075 = vadd.f32 %v1872, %v1973
        %v2076 = vadd.f32 %v1873, %v1976
        %v2077 = vadd.f32 %v1874, %v1981
        %v2078 = vadd.f32 %v1875, %v1984
        %v2079 = vadd.f32 %v1876, %v1989
        %v2080 = vadd.f32 %v1877, %v1992
        %v2081 = vadd.f32 %v1878, %v1997
        %v2082 = vadd.f32 %v1879, %v2000
        %v2083 = vadd.f32 %v1880, %v2005
        %v2084 = vadd.f32 %v1881, %v2008
        %v2085 = vadd.f32 %v1882, %v2013
        %v2086 = vadd.f32 %v1883, %v2016
        %v2087 = vadd.f32 %v1884, %v2021
        %v2088 = vadd.f32 %v1885, %v2024
        %v2089 = vadd.f32 %v1886, %v2029
        %v2090 = vadd.f32 %v1887, %v2032
        %v2091 = vadd.f32 %v1888, %v2037
        %v2092 = vadd.f32 %v1889, %v2040
        %v2093 = vadd.f32 %v1890, %v2045
        %v2094 = vadd.f32 %v1891, %v2048
        %v2095 = vadd.f32 %v1892, %v2053
        %v2096 = vadd.f32 %v1893, %v2056
        %v2097 = vadd.f32 %v1894, %v2061
        %v2098 = vadd.f32 %v1895, %v2064
        %v2099 = vld [vmem:[%s1 + $0x14] sm:$0xf]
        %v2100 = vunpack.c.l.b16 %v838
        %v2101 = vunpack.c.l.b16 %v841
        %v2102 = vpack.c.b16 %v2101, %v2100
        %v2104 = vsel %vm926, %v2102, 0
        %v2107 = vsel %vm975, %v2099, 0
        %2109 = vmatprep.subr.bf16.mxu0 0
        %2110 = vmatpush1.bf16.msra.mxu0 0
        %2111 = vmatprep.subr.bf16.mxu0 0
        %2112 = vmatpush1.bf16.msra.mxu0 0
        %2113 = vmatprep.subr.bf16.mxu0 0
        %2114 = vmatpush1.bf16.msra.mxu0 0
        %2115 = vmatprep.subr.bf16.mxu0 0
        %2116 = vmatpush1.bf16.msra.mxu0 0
        %2117 = vmatprep.subr.bf16.mxu0 0
        %2118 = vmatpush1.bf16.msra.mxu0 0
        %2119 = vmatprep.subr.bf16.mxu0 0
        %2120 = vmatpush1.bf16.msra.mxu0 0
        %2121 = vmatprep.subr.bf16.mxu0 0
        %2122 = vmatpush1.bf16.msra.mxu0 0
        %2123 = vmatprep.subr.bf16.mxu0 0
        %2124 = vmatpush1.bf16.msra.mxu0 %v2107
        %2125 = vmatprep.subr.bf16.mxu0 0
        %2126 = vmatpush2.bf16.msra.mxu0 0
        %2127 = vmatprep.subr.bf16.mxu0 0
        %2128 = vmatpush2.bf16.msra.mxu0 0
        %2129 = vmatprep.subr.bf16.mxu0 0
        %2130 = vmatpush2.bf16.msra.mxu0 0
        %2131 = vmatprep.subr.bf16.mxu0 0
        %2132 = vmatpush2.bf16.msra.mxu0 0
        %2133 = vmatprep.subr.bf16.mxu0 0
        %2134 = vmatpush2.bf16.msra.mxu0 0
        %2135 = vmatprep.subr.bf16.mxu0 0
        %2136 = vmatpush2.bf16.msra.mxu0 0
        %2137 = vmatprep.subr.bf16.mxu0 0
        %2138 = vmatpush2.bf16.msra.mxu0 0
        %2139 = vmatprep.subr.bf16.mxu0 0
        %2140 = vmatpush2.bf16.msra.mxu0 0
        %2141 = vmatprep.mubr.bf16.mxu0 0
        %2142 = vmatmul.mubr.bf16.gmra.mxu0 %v1453
        %v2143 = vpop.f32.mrf.mxu0
        %v2144 = vadd.f32 0.0, %v2143
        %v2145 = vpop.f32.mrf.mxu0
        %v2146 = vpop.f32.mrf.mxu0
        %v2147 = vadd.f32 0.0, %v2146
        %v2148 = vpop.f32.mrf.mxu0
        %2149 = vmatprep.mubr.bf16.mxu0 0
        %2150 = vmatmul.mubr.bf16.gmra.mxu0 %v1456
        %v2151 = vpop.f32.mrf.mxu0
        %v2152 = vadd.f32 0.0, %v2151
        %v2153 = vpop.f32.mrf.mxu0
        %v2154 = vpop.f32.mrf.mxu0
        %v2155 = vadd.f32 0.0, %v2154
        %v2156 = vpop.f32.mrf.mxu0
        %2157 = vmatprep.mubr.bf16.mxu0 0
        %2158 = vmatmul.mubr.bf16.gmra.mxu0 %v1459
        %v2159 = vpop.f32.mrf.mxu0
        %v2160 = vadd.f32 0.0, %v2159
        %v2161 = vpop.f32.mrf.mxu0
        %v2162 = vpop.f32.mrf.mxu0
        %v2163 = vadd.f32 0.0, %v2162
        %v2164 = vpop.f32.mrf.mxu0
        %2165 = vmatprep.mubr.bf16.mxu0 0
        %2166 = vmatmul.mubr.bf16.gmra.mxu0 %v1462
        %v2167 = vpop.f32.mrf.mxu0
        %v2168 = vadd.f32 0.0, %v2167
        %v2169 = vpop.f32.mrf.mxu0
        %v2170 = vpop.f32.mrf.mxu0
        %v2171 = vadd.f32 0.0, %v2170
        %v2172 = vpop.f32.mrf.mxu0
        %2173 = vmatprep.mubr.bf16.mxu0 0
        %2174 = vmatmul.mubr.bf16.gmra.mxu0 %v1465
        %v2175 = vpop.f32.mrf.mxu0
        %v2176 = vadd.f32 0.0, %v2175
        %v2177 = vpop.f32.mrf.mxu0
        %v2178 = vpop.f32.mrf.mxu0
        %v2179 = vadd.f32 0.0, %v2178
        %v2180 = vpop.f32.mrf.mxu0
        %2181 = vmatprep.mubr.bf16.mxu0 0
        %2182 = vmatmul.mubr.bf16.gmra.mxu0 %v1468
        %v2183 = vpop.f32.mrf.mxu0
        %v2184 = vadd.f32 0.0, %v2183
        %v2185 = vpop.f32.mrf.mxu0
        %v2186 = vpop.f32.mrf.mxu0
        %v2187 = vadd.f32 0.0, %v2186
        %v2188 = vpop.f32.mrf.mxu0
        %2189 = vmatprep.mubr.bf16.mxu0 0
        %2190 = vmatmul.mubr.bf16.gmra.mxu0 %v1471
        %v2191 = vpop.f32.mrf.mxu0
        %v2192 = vadd.f32 0.0, %v2191
        %v2193 = vpop.f32.mrf.mxu0
        %v2194 = vpop.f32.mrf.mxu0
        %v2195 = vadd.f32 0.0, %v2194
        %v2196 = vpop.f32.mrf.mxu0
        %2197 = vmatprep.mubr.bf16.mxu0 0
        %2198 = vmatmul.mubr.bf16.gmra.mxu0 %v1474
        %v2199 = vpop.f32.mrf.mxu0
        %v2200 = vadd.f32 0.0, %v2199
        %v2201 = vpop.f32.mrf.mxu0
        %v2202 = vpop.f32.mrf.mxu0
        %v2203 = vadd.f32 0.0, %v2202
        %v2204 = vpop.f32.mrf.mxu0
        %2205 = vmatprep.mubr.bf16.mxu0 0
        %2206 = vmatmul.mubr.bf16.gmra.mxu0 %v1477
        %v2207 = vpop.f32.mrf.mxu0
        %v2208 = vadd.f32 0.0, %v2207
        %v2209 = vpop.f32.mrf.mxu0
        %v2210 = vpop.f32.mrf.mxu0
        %v2211 = vadd.f32 0.0, %v2210
        %v2212 = vpop.f32.mrf.mxu0
        %2213 = vmatprep.mubr.bf16.mxu0 0
        %2214 = vmatmul.mubr.bf16.gmra.mxu0 %v1480
        %v2215 = vpop.f32.mrf.mxu0
        %v2216 = vadd.f32 0.0, %v2215
        %v2217 = vpop.f32.mrf.mxu0
        %v2218 = vpop.f32.mrf.mxu0
        %v2219 = vadd.f32 0.0, %v2218
        %v2220 = vpop.f32.mrf.mxu0
        %2221 = vmatprep.mubr.bf16.mxu0 0
        %2222 = vmatmul.mubr.bf16.gmra.mxu0 %v1483
        %v2223 = vpop.f32.mrf.mxu0
        %v2224 = vadd.f32 0.0, %v2223
        %v2225 = vpop.f32.mrf.mxu0
        %v2226 = vpop.f32.mrf.mxu0
        %v2227 = vadd.f32 0.0, %v2226
        %v2228 = vpop.f32.mrf.mxu0
        %2229 = vmatprep.mubr.bf16.mxu0 0
        %2230 = vmatmul.mubr.bf16.gmra.mxu0 %v1486
        %v2231 = vpop.f32.mrf.mxu0
        %v2232 = vadd.f32 0.0, %v2231
        %v2233 = vpop.f32.mrf.mxu0
        %v2234 = vpop.f32.mrf.mxu0
        %v2235 = vadd.f32 0.0, %v2234
        %v2236 = vpop.f32.mrf.mxu0
        %2237 = vmatprep.mubr.bf16.mxu0 0
        %2238 = vmatmul.mubr.bf16.gmra.mxu0 %v1489
        %v2239 = vpop.f32.mrf.mxu0
        %v2240 = vadd.f32 0.0, %v2239
        %v2241 = vpop.f32.mrf.mxu0
        %v2242 = vpop.f32.mrf.mxu0
        %v2243 = vadd.f32 0.0, %v2242
        %v2244 = vpop.f32.mrf.mxu0
        %2245 = vmatprep.mubr.bf16.mxu0 0
        %2246 = vmatmul.mubr.bf16.gmra.mxu0 %v1492
        %v2247 = vpop.f32.mrf.mxu0
        %v2248 = vadd.f32 0.0, %v2247
        %v2249 = vpop.f32.mrf.mxu0
        %v2250 = vpop.f32.mrf.mxu0
        %v2251 = vadd.f32 0.0, %v2250
        %v2252 = vpop.f32.mrf.mxu0
        %2253 = vmatprep.mubr.bf16.mxu0 0
        %2254 = vmatmul.mubr.bf16.gmra.mxu0 %v1495
        %v2255 = vpop.f32.mrf.mxu0
        %v2256 = vadd.f32 0.0, %v2255
        %v2257 = vpop.f32.mrf.mxu0
        %v2258 = vpop.f32.mrf.mxu0
        %v2259 = vadd.f32 0.0, %v2258
        %v2260 = vpop.f32.mrf.mxu0
        %2261 = vmatprep.mubr.bf16.mxu0 0
        %2262 = vmatmul.mubr.bf16.gmra.mxu0 %v2104
        %v2263 = vpop.f32.mrf.mxu0
        %v2264 = vadd.f32 0.0, %v2263
        %v2265 = vpop.f32.mrf.mxu0
        %v2266 = vpop.f32.mrf.mxu0
        %v2267 = vadd.f32 0.0, %v2266
        %v2268 = vpop.f32.mrf.mxu0
        %2269 = vdwg.mxu0
        %v2270 = vadd.f32 %v2067, %v2144
        %v2271 = vadd.f32 %v2068, %v2147
        %v2272 = vadd.f32 %v2069, %v2152
        %v2273 = vadd.f32 %v2070, %v2155
        %v2274 = vadd.f32 %v2071, %v2160
        %v2275 = vadd.f32 %v2072, %v2163
        %v2276 = vadd.f32 %v2073, %v2168
        %v2277 = vadd.f32 %v2074, %v2171
        %v2278 = vadd.f32 %v2075, %v2176
        %v2279 = vadd.f32 %v2076, %v2179
        %v2280 = vadd.f32 %v2077, %v2184
        %v2281 = vadd.f32 %v2078, %v2187
        %v2282 = vadd.f32 %v2079, %v2192
        %v2283 = vadd.f32 %v2080, %v2195
        %v2284 = vadd.f32 %v2081, %v2200
        %v2285 = vadd.f32 %v2082, %v2203
        %v2286 = vadd.f32 %v2083, %v2208
        %v2287 = vadd.f32 %v2084, %v2211
        %v2288 = vadd.f32 %v2085, %v2216
        %v2289 = vadd.f32 %v2086, %v2219
        %v2290 = vadd.f32 %v2087, %v2224
        %v2291 = vadd.f32 %v2088, %v2227
        %v2292 = vadd.f32 %v2089, %v2232
        %v2293 = vadd.f32 %v2090, %v2235
        %v2294 = vadd.f32 %v2091, %v2240
        %v2295 = vadd.f32 %v2092, %v2243
        %v2296 = vadd.f32 %v2093, %v2248
        %v2297 = vadd.f32 %v2094, %v2251
        %v2298 = vadd.f32 %v2095, %v2256
        %v2299 = vadd.f32 %v2096, %v2259
        %v2300 = vadd.f32 %v2097, %v2264
        %v2301 = vadd.f32 %v2098, %v2267
        %v2302 = vld [vmem:[%s1 + $0x18] sm:$0xf]
        %v2303 = vunpack.c.l.b16 %v255
        %v2304 = vunpack.c.l.b16 %v256
        %v2305 = vpack.c.b16 %v2304, %v2303
        %v2307 = vsel %vm926, %v2305, 0
        %v2310 = vsel %vm975, %v2302, 0
        %2312 = vmatprep.subr.bf16.mxu0 0
        %2313 = vmatpush1.bf16.msra.mxu0 0
        %2314 = vmatprep.subr.bf16.mxu0 0
        %2315 = vmatpush1.bf16.msra.mxu0 0
        %2316 = vmatprep.subr.bf16.mxu0 0
        %2317 = vmatpush1.bf16.msra.mxu0 0
        %2318 = vmatprep.subr.bf16.mxu0 0
        %2319 = vmatpush1.bf16.msra.mxu0 0
        %2320 = vmatprep.subr.bf16.mxu0 0
        %2321 = vmatpush1.bf16.msra.mxu0 0
        %2322 = vmatprep.subr.bf16.mxu0 0
        %2323 = vmatpush1.bf16.msra.mxu0 0
        %2324 = vmatprep.subr.bf16.mxu0 0
        %2325 = vmatpush1.bf16.msra.mxu0 0
        %2326 = vmatprep.subr.bf16.mxu0 0
        %2327 = vmatpush1.bf16.msra.mxu0 %v2310
        %2328 = vmatprep.subr.bf16.mxu0 0
        %2329 = vmatpush2.bf16.msra.mxu0 0
        %2330 = vmatprep.subr.bf16.mxu0 0
        %2331 = vmatpush2.bf16.msra.mxu0 0
        %2332 = vmatprep.subr.bf16.mxu0 0
        %2333 = vmatpush2.bf16.msra.mxu0 0
        %2334 = vmatprep.subr.bf16.mxu0 0
        %2335 = vmatpush2.bf16.msra.mxu0 0
        %2336 = vmatprep.subr.bf16.mxu0 0
        %2337 = vmatpush2.bf16.msra.mxu0 0
        %2338 = vmatprep.subr.bf16.mxu0 0
        %2339 = vmatpush2.bf16.msra.mxu0 0
        %2340 = vmatprep.subr.bf16.mxu0 0
        %2341 = vmatpush2.bf16.msra.mxu0 0
        %2342 = vmatprep.subr.bf16.mxu0 0
        %2343 = vmatpush2.bf16.msra.mxu0 0
        %2344 = vmatprep.mubr.bf16.mxu0 0
        %2345 = vmatmul.mubr.bf16.gmra.mxu0 %v1195
        %v2346 = vpop.f32.mrf.mxu0
        %v2347 = vadd.f32 0.0, %v2346
        %v2348 = vpop.f32.mrf.mxu0
        %v2349 = vpop.f32.mrf.mxu0
        %v2350 = vadd.f32 0.0, %v2349
        %v2351 = vpop.f32.mrf.mxu0
        %2352 = vmatprep.mubr.bf16.mxu0 0
        %2353 = vmatmul.mubr.bf16.gmra.mxu0 %v1198
        %v2354 = vpop.f32.mrf.mxu0
        %v2355 = vadd.f32 0.0, %v2354
        %v2356 = vpop.f32.mrf.mxu0
        %v2357 = vpop.f32.mrf.mxu0
        %v2358 = vadd.f32 0.0, %v2357
        %v2359 = vpop.f32.mrf.mxu0
        %2360 = vmatprep.mubr.bf16.mxu0 0
        %2361 = vmatmul.mubr.bf16.gmra.mxu0 %v1201
        %v2362 = vpop.f32.mrf.mxu0
        %v2363 = vadd.f32 0.0, %v2362
        %v2364 = vpop.f32.mrf.mxu0
        %v2365 = vpop.f32.mrf.mxu0
        %v2366 = vadd.f32 0.0, %v2365
        %v2367 = vpop.f32.mrf.mxu0
        %2368 = vmatprep.mubr.bf16.mxu0 0
        %2369 = vmatmul.mubr.bf16.gmra.mxu0 %v1204
        %v2370 = vpop.f32.mrf.mxu0
        %v2371 = vadd.f32 0.0, %v2370
        %v2372 = vpop.f32.mrf.mxu0
        %v2373 = vpop.f32.mrf.mxu0
        %v2374 = vadd.f32 0.0, %v2373
        %v2375 = vpop.f32.mrf.mxu0
        %2376 = vmatprep.mubr.bf16.mxu0 0
        %2377 = vmatmul.mubr.bf16.gmra.mxu0 %v1207
        %v2378 = vpop.f32.mrf.mxu0
        %v2379 = vadd.f32 0.0, %v2378
        %v2380 = vpop.f32.mrf.mxu0
        %v2381 = vpop.f32.mrf.mxu0
        %v2382 = vadd.f32 0.0, %v2381
        %v2383 = vpop.f32.mrf.mxu0
        %2384 = vmatprep.mubr.bf16.mxu0 0
        %2385 = vmatmul.mubr.bf16.gmra.mxu0 %v1210
        %v2386 = vpop.f32.mrf.mxu0
        %v2387 = vadd.f32 0.0, %v2386
        %v2388 = vpop.f32.mrf.mxu0
        %v2389 = vpop.f32.mrf.mxu0
        %v2390 = vadd.f32 0.0, %v2389
        %v2391 = vpop.f32.mrf.mxu0
        %2392 = vmatprep.mubr.bf16.mxu0 0
        %2393 = vmatmul.mubr.bf16.gmra.mxu0 %v1213
        %v2394 = vpop.f32.mrf.mxu0
        %v2395 = vadd.f32 0.0, %v2394
        %v2396 = vpop.f32.mrf.mxu0
        %v2397 = vpop.f32.mrf.mxu0
        %v2398 = vadd.f32 0.0, %v2397
        %v2399 = vpop.f32.mrf.mxu0
        %2400 = vmatprep.mubr.bf16.mxu0 0
        %2401 = vmatmul.mubr.bf16.gmra.mxu0 %v1216
        %v2402 = vpop.f32.mrf.mxu0
        %v2403 = vadd.f32 0.0, %v2402
        %v2404 = vpop.f32.mrf.mxu0
        %v2405 = vpop.f32.mrf.mxu0
        %v2406 = vadd.f32 0.0, %v2405
        %v2407 = vpop.f32.mrf.mxu0
        %2408 = vmatprep.mubr.bf16.mxu0 0
        %2409 = vmatmul.mubr.bf16.gmra.mxu0 %v1219
        %v2410 = vpop.f32.mrf.mxu0
        %v2411 = vadd.f32 0.0, %v2410
        %v2412 = vpop.f32.mrf.mxu0
        %v2413 = vpop.f32.mrf.mxu0
        %v2414 = vadd.f32 0.0, %v2413
        %v2415 = vpop.f32.mrf.mxu0
        %2416 = vmatprep.mubr.bf16.mxu0 0
        %2417 = vmatmul.mubr.bf16.gmra.mxu0 %v1222
        %v2418 = vpop.f32.mrf.mxu0
        %v2419 = vadd.f32 0.0, %v2418
        %v2420 = vpop.f32.mrf.mxu0
        %v2421 = vpop.f32.mrf.mxu0
        %v2422 = vadd.f32 0.0, %v2421
        %v2423 = vpop.f32.mrf.mxu0
        %2424 = vmatprep.mubr.bf16.mxu0 0
        %2425 = vmatmul.mubr.bf16.gmra.mxu0 %v1225
        %v2426 = vpop.f32.mrf.mxu0
        %v2427 = vadd.f32 0.0, %v2426
        %v2428 = vpop.f32.mrf.mxu0
        %v2429 = vpop.f32.mrf.mxu0
        %v2430 = vadd.f32 0.0, %v2429
        %v2431 = vpop.f32.mrf.mxu0
        %2432 = vmatprep.mubr.bf16.mxu0 0
        %2433 = vmatmul.mubr.bf16.gmra.mxu0 %v1228
        %v2434 = vpop.f32.mrf.mxu0
        %v2435 = vadd.f32 0.0, %v2434
        %v2436 = vpop.f32.mrf.mxu0
        %v2437 = vpop.f32.mrf.mxu0
        %v2438 = vadd.f32 0.0, %v2437
        %v2439 = vpop.f32.mrf.mxu0
        %2440 = vmatprep.mubr.bf16.mxu0 0
        %2441 = vmatmul.mubr.bf16.gmra.mxu0 %v1231
        %v2442 = vpop.f32.mrf.mxu0
        %v2443 = vadd.f32 0.0, %v2442
        %v2444 = vpop.f32.mrf.mxu0
        %v2445 = vpop.f32.mrf.mxu0
        %v2446 = vadd.f32 0.0, %v2445
        %v2447 = vpop.f32.mrf.mxu0
        %2448 = vmatprep.mubr.bf16.mxu0 0
        %2449 = vmatmul.mubr.bf16.gmra.mxu0 %v1234
        %v2450 = vpop.f32.mrf.mxu0
        %v2451 = vadd.f32 0.0, %v2450
        %v2452 = vpop.f32.mrf.mxu0
        %v2453 = vpop.f32.mrf.mxu0
        %v2454 = vadd.f32 0.0, %v2453
        %v2455 = vpop.f32.mrf.mxu0
        %2456 = vmatprep.mubr.bf16.mxu0 0
        %2457 = vmatmul.mubr.bf16.gmra.mxu0 %v1698
        %v2458 = vpop.f32.mrf.mxu0
        %v2459 = vadd.f32 0.0, %v2458
        %v2460 = vpop.f32.mrf.mxu0
        %v2461 = vpop.f32.mrf.mxu0
        %v2462 = vadd.f32 0.0, %v2461
        %v2463 = vpop.f32.mrf.mxu0
        %2464 = vmatprep.mubr.bf16.mxu0 0
        %2465 = vmatmul.mubr.bf16.gmra.mxu0 %v2307
        %v2466 = vpop.f32.mrf.mxu0
        %v2467 = vadd.f32 0.0, %v2466
        %v2468 = vpop.f32.mrf.mxu0
        %v2469 = vpop.f32.mrf.mxu0
        %v2470 = vadd.f32 0.0, %v2469
        %v2471 = vpop.f32.mrf.mxu0
        %2472 = vdwg.mxu0
        %v2473 = vadd.f32 %v2270, %v2347
        %v2474 = vadd.f32 %v2271, %v2350
        %v2475 = vadd.f32 %v2272, %v2355
        %v2476 = vadd.f32 %v2273, %v2358
        %v2477 = vadd.f32 %v2274, %v2363
        %v2478 = vadd.f32 %v2275, %v2366
        %v2479 = vadd.f32 %v2276, %v2371
        %v2480 = vadd.f32 %v2277, %v2374
        %v2481 = vadd.f32 %v2278, %v2379
        %v2482 = vadd.f32 %v2279, %v2382
        %v2483 = vadd.f32 %v2280, %v2387
        %v2484 = vadd.f32 %v2281, %v2390
        %v2485 = vadd.f32 %v2282, %v2395
        %v2486 = vadd.f32 %v2283, %v2398
        %v2487 = vadd.f32 %v2284, %v2403
        %v2488 = vadd.f32 %v2285, %v2406
        %v2489 = vadd.f32 %v2286, %v2411
        %v2490 = vadd.f32 %v2287, %v2414
        %v2491 = vadd.f32 %v2288, %v2419
        %v2492 = vadd.f32 %v2289, %v2422
        %v2493 = vadd.f32 %v2290, %v2427
        %v2494 = vadd.f32 %v2291, %v2430
        %v2495 = vadd.f32 %v2292, %v2435
        %v2496 = vadd.f32 %v2293, %v2438
        %v2497 = vadd.f32 %v2294, %v2443
        %v2498 = vadd.f32 %v2295, %v2446
        %v2499 = vadd.f32 %v2296, %v2451
        %v2500 = vadd.f32 %v2297, %v2454
        %v2501 = vadd.f32 %v2298, %v2459
        %v2502 = vadd.f32 %v2299, %v2462
        %v2503 = vadd.f32 %v2300, %v2467
        %v2504 = vadd.f32 %v2301, %v2470
        %v2505 = vld [vmem:[%s1 + $0x1c] sm:$0xf]
        %v2506 = vunpack.c.l.b16 %v855
        %v2507 = vunpack.c.l.b16 %v865
        %v2508 = vpack.c.b16 %v2507, %v2506
        %v2510 = vsel %vm926, %v2508, 0
        %v2513 = vsel %vm975, %v2505, 0
        %2515 = vmatprep.subr.bf16.mxu0 0
        %2516 = vmatpush1.bf16.msra.mxu0 0
        %2517 = vmatprep.subr.bf16.mxu0 0
        %2518 = vmatpush1.bf16.msra.mxu0 0
        %2519 = vmatprep.subr.bf16.mxu0 0
        %2520 = vmatpush1.bf16.msra.mxu0 0
        %2521 = vmatprep.subr.bf16.mxu0 0
        %2522 = vmatpush1.bf16.msra.mxu0 0
        %2523 = vmatprep.subr.bf16.mxu0 0
        %2524 = vmatpush1.bf16.msra.mxu0 0
        %2525 = vmatprep.subr.bf16.mxu0 0
        %2526 = vmatpush1.bf16.msra.mxu0 0
        %2527 = vmatprep.subr.bf16.mxu0 0
        %2528 = vmatpush1.bf16.msra.mxu0 0
        %2529 = vmatprep.subr.bf16.mxu0 0
        %2530 = vmatpush1.bf16.msra.mxu0 %v2513
        %2531 = vmatprep.subr.bf16.mxu0 0
        %2532 = vmatpush2.bf16.msra.mxu0 0
        %2533 = vmatprep.subr.bf16.mxu0 0
        %2534 = vmatpush2.bf16.msra.mxu0 0
        %2535 = vmatprep.subr.bf16.mxu0 0
        %2536 = vmatpush2.bf16.msra.mxu0 0
        %2537 = vmatprep.subr.bf16.mxu0 0
        %2538 = vmatpush2.bf16.msra.mxu0 0
        %2539 = vmatprep.subr.bf16.mxu0 0
        %2540 = vmatpush2.bf16.msra.mxu0 0
        %2541 = vmatprep.subr.bf16.mxu0 0
        %2542 = vmatpush2.bf16.msra.mxu0 0
        %2543 = vmatprep.subr.bf16.mxu0 0
        %2544 = vmatpush2.bf16.msra.mxu0 0
        %2545 = vmatprep.subr.bf16.mxu0 0
        %2546 = vmatpush2.bf16.msra.mxu0 0
        %2547 = vmatprep.mubr.bf16.mxu0 0
        %2548 = vmatmul.mubr.bf16.gmra.mxu0 %v934
        %v2549 = vpop.f32.mrf.mxu0
        %v2550 = vadd.f32 0.0, %v2549
        %v2551 = vpop.f32.mrf.mxu0
        %v2552 = vpop.f32.mrf.mxu0
        %v2553 = vadd.f32 0.0, %v2552
        %v2554 = vpop.f32.mrf.mxu0
        %2555 = vmatprep.mubr.bf16.mxu0 0
        %2556 = vmatmul.mubr.bf16.gmra.mxu0 %v937
        %v2557 = vpop.f32.mrf.mxu0
        %v2558 = vadd.f32 0.0, %v2557
        %v2559 = vpop.f32.mrf.mxu0
        %v2560 = vpop.f32.mrf.mxu0
        %v2561 = vadd.f32 0.0, %v2560
        %v2562 = vpop.f32.mrf.mxu0
        %2563 = vmatprep.mubr.bf16.mxu0 0
        %2564 = vmatmul.mubr.bf16.gmra.mxu0 %v940
        %v2565 = vpop.f32.mrf.mxu0
        %v2566 = vadd.f32 0.0, %v2565
        %v2567 = vpop.f32.mrf.mxu0
        %v2568 = vpop.f32.mrf.mxu0
        %v2569 = vadd.f32 0.0, %v2568
        %v2570 = vpop.f32.mrf.mxu0
        %2571 = vmatprep.mubr.bf16.mxu0 0
        %2572 = vmatmul.mubr.bf16.gmra.mxu0 %v943
        %v2573 = vpop.f32.mrf.mxu0
        %v2574 = vadd.f32 0.0, %v2573
        %v2575 = vpop.f32.mrf.mxu0
        %v2576 = vpop.f32.mrf.mxu0
        %v2577 = vadd.f32 0.0, %v2576
        %v2578 = vpop.f32.mrf.mxu0
        %2579 = vmatprep.mubr.bf16.mxu0 0
        %2580 = vmatmul.mubr.bf16.gmra.mxu0 %v946
        %v2581 = vpop.f32.mrf.mxu0
        %v2582 = vadd.f32 0.0, %v2581
        %v2583 = vpop.f32.mrf.mxu0
        %v2584 = vpop.f32.mrf.mxu0
        %v2585 = vadd.f32 0.0, %v2584
        %v2586 = vpop.f32.mrf.mxu0
        %2587 = vmatprep.mubr.bf16.mxu0 0
        %2588 = vmatmul.mubr.bf16.gmra.mxu0 %v949
        %v2589 = vpop.f32.mrf.mxu0
        %v2590 = vadd.f32 0.0, %v2589
        %v2591 = vpop.f32.mrf.mxu0
        %v2592 = vpop.f32.mrf.mxu0
        %v2593 = vadd.f32 0.0, %v2592
        %v2594 = vpop.f32.mrf.mxu0
        %2595 = vmatprep.mubr.bf16.mxu0 0
        %2596 = vmatmul.mubr.bf16.gmra.mxu0 %v952
        %v2597 = vpop.f32.mrf.mxu0
        %v2598 = vadd.f32 0.0, %v2597
        %v2599 = vpop.f32.mrf.mxu0
        %v2600 = vpop.f32.mrf.mxu0
        %v2601 = vadd.f32 0.0, %v2600
        %v2602 = vpop.f32.mrf.mxu0
        %2603 = vmatprep.mubr.bf16.mxu0 0
        %2604 = vmatmul.mubr.bf16.gmra.mxu0 %v955
        %v2605 = vpop.f32.mrf.mxu0
        %v2606 = vadd.f32 0.0, %v2605
        %v2607 = vpop.f32.mrf.mxu0
        %v2608 = vpop.f32.mrf.mxu0
        %v2609 = vadd.f32 0.0, %v2608
        %v2610 = vpop.f32.mrf.mxu0
        %2611 = vmatprep.mubr.bf16.mxu0 0
        %2612 = vmatmul.mubr.bf16.gmra.mxu0 %v958
        %v2613 = vpop.f32.mrf.mxu0
        %v2614 = vadd.f32 0.0, %v2613
        %v2615 = vpop.f32.mrf.mxu0
        %v2616 = vpop.f32.mrf.mxu0
        %v2617 = vadd.f32 0.0, %v2616
        %v2618 = vpop.f32.mrf.mxu0
        %2619 = vmatprep.mubr.bf16.mxu0 0
        %2620 = vmatmul.mubr.bf16.gmra.mxu0 %v961
        %v2621 = vpop.f32.mrf.mxu0
        %v2622 = vadd.f32 0.0, %v2621
        %v2623 = vpop.f32.mrf.mxu0
        %v2624 = vpop.f32.mrf.mxu0
        %v2625 = vadd.f32 0.0, %v2624
        %v2626 = vpop.f32.mrf.mxu0
        %2627 = vmatprep.mubr.bf16.mxu0 0
        %2628 = vmatmul.mubr.bf16.gmra.mxu0 %v964
        %v2629 = vpop.f32.mrf.mxu0
        %v2630 = vadd.f32 0.0, %v2629
        %v2631 = vpop.f32.mrf.mxu0
        %v2632 = vpop.f32.mrf.mxu0
        %v2633 = vadd.f32 0.0, %v2632
        %v2634 = vpop.f32.mrf.mxu0
        %2635 = vmatprep.mubr.bf16.mxu0 0
        %2636 = vmatmul.mubr.bf16.gmra.mxu0 %v967
        %v2637 = vpop.f32.mrf.mxu0
        %v2638 = vadd.f32 0.0, %v2637
        %v2639 = vpop.f32.mrf.mxu0
        %v2640 = vpop.f32.mrf.mxu0
        %v2641 = vadd.f32 0.0, %v2640
        %v2642 = vpop.f32.mrf.mxu0
        %2643 = vmatprep.mubr.bf16.mxu0 0
        %2644 = vmatmul.mubr.bf16.gmra.mxu0 %v970
        %v2645 = vpop.f32.mrf.mxu0
        %v2646 = vadd.f32 0.0, %v2645
        %v2647 = vpop.f32.mrf.mxu0
        %v2648 = vpop.f32.mrf.mxu0
        %v2649 = vadd.f32 0.0, %v2648
        %v2650 = vpop.f32.mrf.mxu0
        %2651 = vmatprep.mubr.bf16.mxu0 0
        %2652 = vmatmul.mubr.bf16.gmra.mxu0 %v973
        %v2653 = vpop.f32.mrf.mxu0
        %v2654 = vadd.f32 0.0, %v2653
        %v2655 = vpop.f32.mrf.mxu0
        %v2656 = vpop.f32.mrf.mxu0
        %v2657 = vadd.f32 0.0, %v2656
        %v2658 = vpop.f32.mrf.mxu0
        %2659 = vmatprep.mubr.bf16.mxu0 0
        %2660 = vmatmul.mubr.bf16.gmra.mxu0 %v1901
        %v2661 = vpop.f32.mrf.mxu0
        %v2662 = vadd.f32 0.0, %v2661
        %v2663 = vpop.f32.mrf.mxu0
        %v2664 = vpop.f32.mrf.mxu0
        %v2665 = vadd.f32 0.0, %v2664
        %v2666 = vpop.f32.mrf.mxu0
        %2667 = vmatprep.mubr.bf16.mxu0 0
        %2668 = vmatmul.mubr.bf16.gmra.mxu0 %v2510
        %v2669 = vpop.f32.mrf.mxu0
        %v2670 = vadd.f32 0.0, %v2669
        %v2671 = vpop.f32.mrf.mxu0
        %v2672 = vpop.f32.mrf.mxu0
        %v2673 = vadd.f32 0.0, %v2672
        %v2674 = vpop.f32.mrf.mxu0
        %2675 = vdwg.mxu0
        %v2676 = vadd.f32 %v2473, %v2550
        %v2677 = vadd.f32 %v2474, %v2553
        %v2678 = vadd.f32 %v2475, %v2558
        %v2679 = vadd.f32 %v2476, %v2561
        %v2680 = vadd.f32 %v2477, %v2566
        %v2681 = vadd.f32 %v2478, %v2569
        %v2682 = vadd.f32 %v2479, %v2574
        %v2683 = vadd.f32 %v2480, %v2577
        %v2684 = vadd.f32 %v2481, %v2582
        %v2685 = vadd.f32 %v2482, %v2585
        %v2686 = vadd.f32 %v2483, %v2590
        %v2687 = vadd.f32 %v2484, %v2593
        %v2688 = vadd.f32 %v2485, %v2598
        %v2689 = vadd.f32 %v2486, %v2601
        %v2690 = vadd.f32 %v2487, %v2606
        %v2691 = vadd.f32 %v2488, %v2609
        %v2692 = vadd.f32 %v2489, %v2614
        %v2693 = vadd.f32 %v2490, %v2617
        %v2694 = vadd.f32 %v2491, %v2622
        %v2695 = vadd.f32 %v2492, %v2625
        %v2696 = vadd.f32 %v2493, %v2630
        %v2697 = vadd.f32 %v2494, %v2633
        %v2698 = vadd.f32 %v2495, %v2638
        %v2699 = vadd.f32 %v2496, %v2641
        %v2700 = vadd.f32 %v2497, %v2646
        %v2701 = vadd.f32 %v2498, %v2649
        %v2702 = vadd.f32 %v2499, %v2654
        %v2703 = vadd.f32 %v2500, %v2657
        %v2704 = vadd.f32 %v2501, %v2662
        %v2705 = vadd.f32 %v2502, %v2665
        %v2706 = vadd.f32 %v2503, %v2670
        %v2707 = vadd.f32 %v2504, %v2673
        %v2708 = vld [vmem:[%s1 + $0x20] sm:$0xf]
        %v2709 = vunpack.c.l.b16 %v872
        %v2710 = vunpack.c.l.b16 %v875
        %v2711 = vpack.c.b16 %v2710, %v2709
        %v2713 = vsel %vm926, %v2711, 0
        %v2716 = vsel %vm975, %v2708, 0
        %2718 = vmatprep.subr.bf16.mxu0 0
        %2719 = vmatpush1.bf16.msra.mxu0 0
        %2720 = vmatprep.subr.bf16.mxu0 0
        %2721 = vmatpush1.bf16.msra.mxu0 0
        %2722 = vmatprep.subr.bf16.mxu0 0
        %2723 = vmatpush1.bf16.msra.mxu0 0
        %2724 = vmatprep.subr.bf16.mxu0 0
        %2725 = vmatpush1.bf16.msra.mxu0 0
        %2726 = vmatprep.subr.bf16.mxu0 0
        %2727 = vmatpush1.bf16.msra.mxu0 0
        %2728 = vmatprep.subr.bf16.mxu0 0
        %2729 = vmatpush1.bf16.msra.mxu0 0
        %2730 = vmatprep.subr.bf16.mxu0 0
        %2731 = vmatpush1.bf16.msra.mxu0 0
        %2732 = vmatprep.subr.bf16.mxu0 0
        %2733 = vmatpush1.bf16.msra.mxu0 %v2716
        %2734 = vmatprep.subr.bf16.mxu0 0
        %2735 = vmatpush2.bf16.msra.mxu0 0
        %2736 = vmatprep.subr.bf16.mxu0 0
        %2737 = vmatpush2.bf16.msra.mxu0 0
        %2738 = vmatprep.subr.bf16.mxu0 0
        %2739 = vmatpush2.bf16.msra.mxu0 0
        %2740 = vmatprep.subr.bf16.mxu0 0
        %2741 = vmatpush2.bf16.msra.mxu0 0
        %2742 = vmatprep.subr.bf16.mxu0 0
        %2743 = vmatpush2.bf16.msra.mxu0 0
        %2744 = vmatprep.subr.bf16.mxu0 0
        %2745 = vmatpush2.bf16.msra.mxu0 0
        %2746 = vmatprep.subr.bf16.mxu0 0
        %2747 = vmatpush2.bf16.msra.mxu0 0
        %2748 = vmatprep.subr.bf16.mxu0 0
        %2749 = vmatpush2.bf16.msra.mxu0 0
        %2750 = vmatprep.mubr.bf16.mxu0 0
        %2751 = vmatmul.mubr.bf16.gmra.mxu0 %v1456
        %v2752 = vpop.f32.mrf.mxu0
        %v2753 = vadd.f32 0.0, %v2752
        %v2754 = vpop.f32.mrf.mxu0
        %v2755 = vpop.f32.mrf.mxu0
        %v2756 = vadd.f32 0.0, %v2755
        %v2757 = vpop.f32.mrf.mxu0
        %2758 = vmatprep.mubr.bf16.mxu0 0
        %2759 = vmatmul.mubr.bf16.gmra.mxu0 %v1459
        %v2760 = vpop.f32.mrf.mxu0
        %v2761 = vadd.f32 0.0, %v2760
        %v2762 = vpop.f32.mrf.mxu0
        %v2763 = vpop.f32.mrf.mxu0
        %v2764 = vadd.f32 0.0, %v2763
        %v2765 = vpop.f32.mrf.mxu0
        %2766 = vmatprep.mubr.bf16.mxu0 0
        %2767 = vmatmul.mubr.bf16.gmra.mxu0 %v1462
        %v2768 = vpop.f32.mrf.mxu0
        %v2769 = vadd.f32 0.0, %v2768
        %v2770 = vpop.f32.mrf.mxu0
        %v2771 = vpop.f32.mrf.mxu0
        %v2772 = vadd.f32 0.0, %v2771
        %v2773 = vpop.f32.mrf.mxu0
        %2774 = vmatprep.mubr.bf16.mxu0 0
        %2775 = vmatmul.mubr.bf16.gmra.mxu0 %v1465
        %v2776 = vpop.f32.mrf.mxu0
        %v2777 = vadd.f32 0.0, %v2776
        %v2778 = vpop.f32.mrf.mxu0
        %v2779 = vpop.f32.mrf.mxu0
        %v2780 = vadd.f32 0.0, %v2779
        %v2781 = vpop.f32.mrf.mxu0
        %2782 = vmatprep.mubr.bf16.mxu0 0
        %2783 = vmatmul.mubr.bf16.gmra.mxu0 %v1468
        %v2784 = vpop.f32.mrf.mxu0
        %v2785 = vadd.f32 0.0, %v2784
        %v2786 = vpop.f32.mrf.mxu0
        %v2787 = vpop.f32.mrf.mxu0
        %v2788 = vadd.f32 0.0, %v2787
        %v2789 = vpop.f32.mrf.mxu0
        %2790 = vmatprep.mubr.bf16.mxu0 0
        %2791 = vmatmul.mubr.bf16.gmra.mxu0 %v1471
        %v2792 = vpop.f32.mrf.mxu0
        %v2793 = vadd.f32 0.0, %v2792
        %v2794 = vpop.f32.mrf.mxu0
        %v2795 = vpop.f32.mrf.mxu0
        %v2796 = vadd.f32 0.0, %v2795
        %v2797 = vpop.f32.mrf.mxu0
        %2798 = vmatprep.mubr.bf16.mxu0 0
        %2799 = vmatmul.mubr.bf16.gmra.mxu0 %v1474
        %v2800 = vpop.f32.mrf.mxu0
        %v2801 = vadd.f32 0.0, %v2800
        %v2802 = vpop.f32.mrf.mxu0
        %v2803 = vpop.f32.mrf.mxu0
        %v2804 = vadd.f32 0.0, %v2803
        %v2805 = vpop.f32.mrf.mxu0
        %2806 = vmatprep.mubr.bf16.mxu0 0
        %2807 = vmatmul.mubr.bf16.gmra.mxu0 %v1477
        %v2808 = vpop.f32.mrf.mxu0
        %v2809 = vadd.f32 0.0, %v2808
        %v2810 = vpop.f32.mrf.mxu0
        %v2811 = vpop.f32.mrf.mxu0
        %v2812 = vadd.f32 0.0, %v2811
        %v2813 = vpop.f32.mrf.mxu0
        %2814 = vmatprep.mubr.bf16.mxu0 0
        %2815 = vmatmul.mubr.bf16.gmra.mxu0 %v1480
        %v2816 = vpop.f32.mrf.mxu0
        %v2817 = vadd.f32 0.0, %v2816
        %v2818 = vpop.f32.mrf.mxu0
        %v2819 = vpop.f32.mrf.mxu0
        %v2820 = vadd.f32 0.0, %v2819
        %v2821 = vpop.f32.mrf.mxu0
        %2822 = vmatprep.mubr.bf16.mxu0 0
        %2823 = vmatmul.mubr.bf16.gmra.mxu0 %v1483
        %v2824 = vpop.f32.mrf.mxu0
        %v2825 = vadd.f32 0.0, %v2824
        %v2826 = vpop.f32.mrf.mxu0
        %v2827 = vpop.f32.mrf.mxu0
        %v2828 = vadd.f32 0.0, %v2827
        %v2829 = vpop.f32.mrf.mxu0
        %2830 = vmatprep.mubr.bf16.mxu0 0
        %2831 = vmatmul.mubr.bf16.gmra.mxu0 %v1486
        %v2832 = vpop.f32.mrf.mxu0
        %v2833 = vadd.f32 0.0, %v2832
        %v2834 = vpop.f32.mrf.mxu0
        %v2835 = vpop.f32.mrf.mxu0
        %v2836 = vadd.f32 0.0, %v2835
        %v2837 = vpop.f32.mrf.mxu0
        %2838 = vmatprep.mubr.bf16.mxu0 0
        %2839 = vmatmul.mubr.bf16.gmra.mxu0 %v1489
        %v2840 = vpop.f32.mrf.mxu0
        %v2841 = vadd.f32 0.0, %v2840
        %v2842 = vpop.f32.mrf.mxu0
        %v2843 = vpop.f32.mrf.mxu0
        %v2844 = vadd.f32 0.0, %v2843
        %v2845 = vpop.f32.mrf.mxu0
        %2846 = vmatprep.mubr.bf16.mxu0 0
        %2847 = vmatmul.mubr.bf16.gmra.mxu0 %v1492
        %v2848 = vpop.f32.mrf.mxu0
        %v2849 = vadd.f32 0.0, %v2848
        %v2850 = vpop.f32.mrf.mxu0
        %v2851 = vpop.f32.mrf.mxu0
        %v2852 = vadd.f32 0.0, %v2851
        %v2853 = vpop.f32.mrf.mxu0
        %2854 = vmatprep.mubr.bf16.mxu0 0
        %2855 = vmatmul.mubr.bf16.gmra.mxu0 %v1495
        %v2856 = vpop.f32.mrf.mxu0
        %v2857 = vadd.f32 0.0, %v2856
        %v2858 = vpop.f32.mrf.mxu0
        %v2859 = vpop.f32.mrf.mxu0
        %v2860 = vadd.f32 0.0, %v2859
        %v2861 = vpop.f32.mrf.mxu0
        %2862 = vmatprep.mubr.bf16.mxu0 0
        %2863 = vmatmul.mubr.bf16.gmra.mxu0 %v2104
        %v2864 = vpop.f32.mrf.mxu0
        %v2865 = vadd.f32 0.0, %v2864
        %v2866 = vpop.f32.mrf.mxu0
        %v2867 = vpop.f32.mrf.mxu0
        %v2868 = vadd.f32 0.0, %v2867
        %v2869 = vpop.f32.mrf.mxu0
        %2870 = vmatprep.mubr.bf16.mxu0 0
        %2871 = vmatmul.mubr.bf16.gmra.mxu0 %v2713
        %v2872 = vpop.f32.mrf.mxu0
        %v2873 = vadd.f32 0.0, %v2872
        %v2874 = vpop.f32.mrf.mxu0
        %v2875 = vpop.f32.mrf.mxu0
        %v2876 = vadd.f32 0.0, %v2875
        %v2877 = vpop.f32.mrf.mxu0
        %2878 = vdwg.mxu0
        %v2879 = vadd.f32 %v2676, %v2753
        %v2880 = vadd.f32 %v2677, %v2756
        %v2881 = vadd.f32 %v2678, %v2761
        %v2882 = vadd.f32 %v2679, %v2764
        %v2883 = vadd.f32 %v2680, %v2769
        %v2884 = vadd.f32 %v2681, %v2772
        %v2885 = vadd.f32 %v2682, %v2777
        %v2886 = vadd.f32 %v2683, %v2780
        %v2887 = vadd.f32 %v2684, %v2785
        %v2888 = vadd.f32 %v2685, %v2788
        %v2889 = vadd.f32 %v2686, %v2793
        %v2890 = vadd.f32 %v2687, %v2796
        %v2891 = vadd.f32 %v2688, %v2801
        %v2892 = vadd.f32 %v2689, %v2804
        %v2893 = vadd.f32 %v2690, %v2809
        %v2894 = vadd.f32 %v2691, %v2812
        %v2895 = vadd.f32 %v2692, %v2817
        %v2896 = vadd.f32 %v2693, %v2820
        %v2897 = vadd.f32 %v2694, %v2825
        %v2898 = vadd.f32 %v2695, %v2828
        %v2899 = vadd.f32 %v2696, %v2833
        %v2900 = vadd.f32 %v2697, %v2836
        %v2901 = vadd.f32 %v2698, %v2841
        %v2902 = vadd.f32 %v2699, %v2844
        %v2903 = vadd.f32 %v2700, %v2849
        %v2904 = vadd.f32 %v2701, %v2852
        %v2905 = vadd.f32 %v2702, %v2857
        %v2906 = vadd.f32 %v2703, %v2860
        %v2907 = vadd.f32 %v2704, %v2865
        %v2908 = vadd.f32 %v2705, %v2868
        %v2909 = vadd.f32 %v2706, %v2873
        %v2910 = vadd.f32 %v2707, %v2876
        %v2911 = vld [vmem:[%s2] sm:$0x1]
        %v2913 = vlaneseq
        %v2914 = vshrl.u32 %v2913, 7
        %v2915 = vsub.s32 0, %v2914
        %v2916 = vrot.slane %v2911, %v2915
        %v2918 = vadd.f32 %v2879, %v2916
        %v2919 = vadd.f32 %v2880, %v2916
        %v2920 = vadd.f32 %v2881, %v2916
        %v2921 = vadd.f32 %v2882, %v2916
        %v2922 = vadd.f32 %v2883, %v2916
        %v2923 = vadd.f32 %v2884, %v2916
        %v2924 = vadd.f32 %v2885, %v2916
        %v2925 = vadd.f32 %v2886, %v2916
        %v2926 = vadd.f32 %v2887, %v2916
        %v2927 = vadd.f32 %v2888, %v2916
        %v2928 = vadd.f32 %v2889, %v2916
        %v2929 = vadd.f32 %v2890, %v2916
        %v2930 = vadd.f32 %v2891, %v2916
        %v2931 = vadd.f32 %v2892, %v2916
        %v2932 = vadd.f32 %v2893, %v2916
        %v2933 = vadd.f32 %v2894, %v2916
        %v2934 = vadd.f32 %v2895, %v2916
        %v2935 = vadd.f32 %v2896, %v2916
        %v2936 = vadd.f32 %v2897, %v2916
        %v2937 = vadd.f32 %v2898, %v2916
        %v2938 = vadd.f32 %v2899, %v2916
        %v2939 = vadd.f32 %v2900, %v2916
        %v2940 = vadd.f32 %v2901, %v2916
        %v2941 = vadd.f32 %v2902, %v2916
        %v2942 = vadd.f32 %v2903, %v2916
        %v2943 = vadd.f32 %v2904, %v2916
        %v2944 = vadd.f32 %v2905, %v2916
        %v2945 = vadd.f32 %v2906, %v2916
        %v2946 = vadd.f32 %v2907, %v2916
        %v2947 = vadd.f32 %v2908, %v2916
        %v2948 = vadd.f32 %v2909, %v2916
        %v2949 = vadd.f32 %v2910, %v2916
        %v2950 = vmax.f32 %v2918, 0.0
        %v2951 = vmax.f32 %v2919, 0.0
        %v2952 = vmax.f32 %v2920, 0.0
        %v2953 = vmax.f32 %v2921, 0.0
        %v2954 = vmax.f32 %v2922, 0.0
        %v2955 = vmax.f32 %v2923, 0.0
        %v2956 = vmax.f32 %v2924, 0.0
        %v2957 = vmax.f32 %v2925, 0.0
        %v2958 = vmax.f32 %v2926, 0.0
        %v2959 = vmax.f32 %v2927, 0.0
        %v2960 = vmax.f32 %v2928, 0.0
        %v2961 = vmax.f32 %v2929, 0.0
        %v2962 = vmax.f32 %v2930, 0.0
        %v2963 = vmax.f32 %v2931, 0.0
        %v2964 = vmax.f32 %v2932, 0.0
        %v2965 = vmax.f32 %v2933, 0.0
        %v2966 = vmax.f32 %v2934, 0.0
        %v2967 = vmax.f32 %v2935, 0.0
        %v2968 = vmax.f32 %v2936, 0.0
        %v2969 = vmax.f32 %v2937, 0.0
        %v2970 = vmax.f32 %v2938, 0.0
        %v2971 = vmax.f32 %v2939, 0.0
        %v2972 = vmax.f32 %v2940, 0.0
        %v2973 = vmax.f32 %v2941, 0.0
        %v2974 = vmax.f32 %v2942, 0.0
        %v2975 = vmax.f32 %v2943, 0.0
        %v2976 = vmax.f32 %v2944, 0.0
        %v2977 = vmax.f32 %v2945, 0.0
        %v2978 = vmax.f32 %v2946, 0.0
        %v2979 = vmax.f32 %v2947, 0.0
        %v2980 = vmax.f32 %v2948, 0.0
        %v2981 = vmax.f32 %v2949, 0.0
        %v2982 = vpack.c.bf16 %v2951, %v2950
        %v2983 = vpack.c.bf16 %v2953, %v2952
        %v2984 = vpack.c.bf16 %v2955, %v2954
        %v2985 = vpack.c.bf16 %v2957, %v2956
        %v2986 = vpack.c.bf16 %v2959, %v2958
        %v2987 = vpack.c.bf16 %v2961, %v2960
        %v2988 = vpack.c.bf16 %v2963, %v2962
        %v2989 = vpack.c.bf16 %v2965, %v2964
        %v2990 = vpack.c.bf16 %v2967, %v2966
        %v2991 = vpack.c.bf16 %v2969, %v2968
        %v2992 = vpack.c.bf16 %v2971, %v2970
        %v2993 = vpack.c.bf16 %v2973, %v2972
        %v2994 = vpack.c.bf16 %v2975, %v2974
        %v2995 = vpack.c.bf16 %v2977, %v2976
        %v2996 = vpack.c.bf16 %v2979, %v2978
        %v2997 = vpack.c.bf16 %v2981, %v2980
        %v3014 = vunpack.c.l.b16 %v2982
        %v3015 = vunpack.c.h.b16 %v2982
        %v3016 = vunpack.c.l.b16 %v2983
        %v3017 = vunpack.c.h.b16 %v2983
        %v3018 = vunpack.c.l.b16 %v2984
        %v3019 = vunpack.c.h.b16 %v2984
        %v3020 = vunpack.c.l.b16 %v2985
        %v3021 = vunpack.c.h.b16 %v2985
        %v3022 = vunpack.c.l.b16 %v2986
        %v3023 = vunpack.c.h.b16 %v2986
        %v3024 = vunpack.c.l.b16 %v2987
        %v3025 = vunpack.c.h.b16 %v2987
        %v3026 = vunpack.c.l.b16 %v2988
        %v3027 = vunpack.c.h.b16 %v2988
        %v3028 = vunpack.c.l.b16 %v2989
        %v3029 = vunpack.c.h.b16 %v2989
        %v3030 = vunpack.c.l.b16 %v2990
        %v3031 = vunpack.c.h.b16 %v2990
        %v3032 = vunpack.c.l.b16 %v2991
        %v3033 = vunpack.c.h.b16 %v2991
        %v3034 = vunpack.c.l.b16 %v2992
        %v3035 = vunpack.c.h.b16 %v2992
        %v3036 = vunpack.c.l.b16 %v2993
        %v3037 = vunpack.c.h.b16 %v2993
        %v3038 = vunpack.c.l.b16 %v2994
        %v3039 = vunpack.c.h.b16 %v2994
        %v3040 = vunpack.c.l.b16 %v2995
        %v3041 = vunpack.c.h.b16 %v2995
        %v3042 = vunpack.c.l.b16 %v2996
        %v3043 = vunpack.c.h.b16 %v2996
        %v3044 = vunpack.c.l.b16 %v2997
        %v3045 = vunpack.c.h.b16 %v2997
        %v3046 = vpack.c.b16 %v3014, %v3014
        %v3047 = vpack.c.b16 %v3015, %v3015
        %v3048 = vpack.c.b16 %v3016, %v3016
        %v3049 = vpack.c.b16 %v3017, %v3017
        %v3050 = vpack.c.b16 %v3018, %v3018
        %v3051 = vpack.c.b16 %v3019, %v3019
        %v3052 = vpack.c.b16 %v3020, %v3020
        %v3053 = vpack.c.b16 %v3021, %v3021
        %v3054 = vpack.c.b16 %v3022, %v3022
        %v3055 = vpack.c.b16 %v3023, %v3023
        %v3056 = vpack.c.b16 %v3024, %v3024
        %v3057 = vpack.c.b16 %v3025, %v3025
        %v3058 = vpack.c.b16 %v3026, %v3026
        %v3059 = vpack.c.b16 %v3027, %v3027
        %v3060 = vpack.c.b16 %v3028, %v3028
        %v3061 = vpack.c.b16 %v3029, %v3029
        %v3062 = vpack.c.b16 %v3030, %v3030
        %v3063 = vpack.c.b16 %v3031, %v3031
        %v3064 = vpack.c.b16 %v3032, %v3032
        %v3065 = vpack.c.b16 %v3033, %v3033
        %v3066 = vpack.c.b16 %v3034, %v3034
        %v3067 = vpack.c.b16 %v3035, %v3035
        %v3068 = vpack.c.b16 %v3036, %v3036
        %v3069 = vpack.c.b16 %v3037, %v3037
        %v3070 = vpack.c.b16 %v3038, %v3038
        %v3071 = vpack.c.b16 %v3039, %v3039
        %v3072 = vpack.c.b16 %v3040, %v3040
        %v3073 = vpack.c.b16 %v3041, %v3041
        %v3074 = vpack.c.b16 %v3042, %v3042
        %v3075 = vpack.c.b16 %v3043, %v3043
        %v3076 = vpack.c.b16 %v3044, %v3044
        %v3077 = vpack.c.b16 %v3045, %v3045
        %vm3110 = vcmask 519168
        %3111 = vst.msk [vmem:[%s190] sm:$0xf] %vm3110, %v3046
        %3112 = vst.msk [vmem:[%s190 + $0x4] sm:$0xf] %vm3110, %v3047
        %3113 = vst.msk [vmem:[%s190 + $0x8] sm:$0xf] %vm3110, %v3048
        %3114 = vst.msk [vmem:[%s190 + $0xc] sm:$0xf] %vm3110, %v3049
        %3115 = vst.msk [vmem:[%s190 + $0x10] sm:$0xf] %vm3110, %v3050
        %3116 = vst.msk [vmem:[%s190 + $0x14] sm:$0xf] %vm3110, %v3051
        %3117 = vst.msk [vmem:[%s190 + $0x18] sm:$0xf] %vm3110, %v3052
        %3118 = vst.msk [vmem:[%s190 + $0x1c] sm:$0xf] %vm3110, %v3053
        %3119 = vst.msk [vmem:[%s190 + $0x20] sm:$0xf] %vm3110, %v3054
        %3120 = vst.msk [vmem:[%s190 + $0x24] sm:$0xf] %vm3110, %v3055
        %3121 = vst.msk [vmem:[%s190 + $0x28] sm:$0xf] %vm3110, %v3056
        %3122 = vst.msk [vmem:[%s190 + $0x2c] sm:$0xf] %vm3110, %v3057
        %3123 = vst.msk [vmem:[%s190 + $0x30] sm:$0xf] %vm3110, %v3058
        %3124 = vst.msk [vmem:[%s190 + $0x34] sm:$0xf] %vm3110, %v3059
        %3125 = vst.msk [vmem:[%s190 + $0x38] sm:$0xf] %vm3110, %v3060
        %3126 = vst.msk [vmem:[%s190 + $0x3c] sm:$0xf] %vm3110, %v3061
        %3127 = vst.msk [vmem:[%s190 + $0x40] sm:$0xf] %vm3110, %v3062
        %3128 = vst.msk [vmem:[%s190 + $0x44] sm:$0xf] %vm3110, %v3063
        %3129 = vst.msk [vmem:[%s190 + $0x48] sm:$0xf] %vm3110, %v3064
        %3130 = vst.msk [vmem:[%s190 + $0x4c] sm:$0xf] %vm3110, %v3065
        %3131 = vst.msk [vmem:[%s190 + $0x50] sm:$0xf] %vm3110, %v3066
        %3132 = vst.msk [vmem:[%s190 + $0x54] sm:$0xf] %vm3110, %v3067
        %3133 = vst.msk [vmem:[%s190 + $0x58] sm:$0xf] %vm3110, %v3068
        %3134 = vst.msk [vmem:[%s190 + $0x5c] sm:$0xf] %vm3110, %v3069
        %3135 = vst.msk [vmem:[%s190 + $0x60] sm:$0xf] %vm3110, %v3070
        %3136 = vst.msk [vmem:[%s190 + $0x64] sm:$0xf] %vm3110, %v3071
        %3137 = vst.msk [vmem:[%s190 + $0x68] sm:$0xf] %vm3110, %v3072
        %3138 = vst.msk [vmem:[%s190 + $0x6c] sm:$0xf] %vm3110, %v3073
        %3139 = vst.msk [vmem:[%s190 + $0x70] sm:$0xf] %vm3110, %v3074
        %3140 = vst.msk [vmem:[%s190 + $0x74] sm:$0xf] %vm3110, %v3075
        %3141 = vst.msk [vmem:[%s190 + $0x78] sm:$0xf] %vm3110, %v3076
        %3142 = vst.msk [vmem:[%s190 + $0x7c] sm:$0xf] %vm3110, %v3077
        %s3143 = sand.u32 %s109, 1
        %s3144 = scalar_lea.sflag [#allocation3], %s3143
        %s3145 = sand.u32 %s109, 1
        %s3146 = smul.addr %s3145, 128
        %s3147 = scalar_lea.vmem [#allocation2], %s3146
        // Predicated region
        $region33: #{tpu_custom_call.1} parent=31 // pred_check
          %p3148 = pneg %p119
        $region34: #{tpu_custom_call.1} parent=31 // pred_check_branch
          %3150 = sbr.rel (%p3148) target = $region36
        $region35: #{tpu_custom_call.1} parent=31 // pred_region
          %s3151 = smul.u32 16, %s22
          %s3153 = ssub.s32 2048, 2048
          %3154 = vsyncadd %s3144, %s3153
          %s3155 = smul.addr %s3151, 2
          %s3156 = smul.addr %s21, 32
          %s3157 = sadd.s32 %s3155, %s3156
          %s3158 = smul.addr %s3157, 64
          %s3159 = scalar_lea.hbm %s3, %s3158
          %s3160 = sshll.u32 %s3147, 4
          %s3161 = int_to_ptr.vmem [resolvable:$true] %s3160
          %3166 = dma.vmem_to_hbm [thread:$0]  %s3161, 2048, %s3159, %s3144, 64, 64, 4
        $region36: #{tpu_custom_call.1} parent=31 // pred_fallthru
          _
      $region32: #{tpu_custom_call.1} parent=5 // pred_fallthru
        _
      %p3167 = scmp.le.s32.totalorder 2, %s12
      // Predicated region
      $region37: #{tpu_custom_call.1} parent=5 // pred_check
        %p3168 = pneg %p3167
      $region38: #{tpu_custom_call.1} parent=5 // pred_check_branch
        %3170 = sbr.rel (%p3168) target = $region40
      $region39: #{tpu_custom_call.1} parent=5 // pred_region
        %s3171 = ssub.s32 %s12, 2
        // Predicated region
        $region41: #{tpu_custom_call.1} parent=39 // pred_check
          %p3172 = pneg %p125
        $region42: #{tpu_custom_call.1} parent=39 // pred_check_branch
          %3174 = sbr.rel (%p3172) target = $region44
        $region43: #{tpu_custom_call.1} parent=39 // pred_region
          %s3175 = sand.u32 %s110, 1
          %s3176 = scalar_lea.sflag [#allocation3], %s3175
          %s3177 = sand.u32 %s110, 1
          %s3178 = smul.addr %s3177, 128
          %s3179 = scalar_lea.vmem [#allocation2], %s3178
          %3180 = dma.done %s3176, 2048
        $region44: #{tpu_custom_call.1} parent=39 // pred_fallthru
          _
      $region40: #{tpu_custom_call.1} parent=5 // pred_fallthru
        _
    $region6: #{tpu_custom_call.1} parent=1 // loop_footer
      %s16 = sadd.s32 1, %s12
    $region7: #{tpu_custom_call.1} parent=1 // loop_footer_branch
      %11 = sbr.rel target = $region3
    $region8: #{tpu_custom_call.1} parent=1 // loop_exit
      _
    %3181 = vsyncpa [#allocation3], 1
    %s3182 = scalar_lea.sflag [#allocation3], 1
    %3183 = vsyncpa %s3182, 1

</llo_original>
